<compile_context>
chip_gen: v5e
topology: v5e:2x2
jax: 0.10.0
libtpu: 0.0.40
codegen_flags: <defaults>
</compile_context>

<pallas_src>
import functools

import jax
import jax.numpy as jnp
from jax.experimental import pallas as pl
from jax.experimental.pallas import tpu as pltpu

# MXU input precision: bf16 halves MXU cost and vreg pressure on v6e/v7x and
# is fine on v5e as well; all accumulation and elementwise epilogues stay f32.
# Set to jnp.float32 for an exact-f32 forward.
MXU_DTYPE = jnp.bfloat16


def _round_up(x, m):
    return ((x + m - 1) // m) * m


# ---------------------------------------------------------------------------
# Fused kernel
# ---------------------------------------------------------------------------
def _conv_bn_relu(a, w_flat, scale, shift, kernel_size):
    """Conv1d('same') + folded BN + ReLU over a whole batch tile (im2col matmul).

    a:      (Bt, T, Cin)  f32 activation
    w_flat: (K*Cin, Cout) weight, row index = k*Cin + c (MXU_DTYPE)
    scale:  (1, Cout)     gamma / sqrt(var + eps)           (f32)
    shift:  (1, Cout)     (conv_bias - mean) * scale + beta (f32)
    returns (Bt, T, Cout) f32
    """
    bt, t, cin = a.shape
    cout = w_flat.shape[1]
    pad = kernel_size // 2
    # Padded time length rounded up to a multiple of 8 sublanes.
    tp = _round_up(t + 2 * pad, 8)
    parts = []
    if pad > 0:
        parts.append(jnp.zeros((bt, pad, cin), a.dtype))
    parts.append(a)
    post = tp - t - pad
    if post > 0:
        parts.append(jnp.zeros((bt, post, cin), a.dtype))
    ap = jnp.concatenate(parts, axis=1) if len(parts) > 1 else a     # (Bt, tp, Cin)

    # im2col for the whole batch tile -> one deep MXU contraction per layer.
    cols = jnp.concatenate([ap[:, k:k + t, :] for k in range(kernel_size)],
                           axis=-1)                                  # (Bt, T, K*Cin)
    cols2d = cols.reshape(bt * t, kernel_size * cin)                 # (Bt*T, K*Cin)
    y = jnp.dot(cols2d.astype(w_flat.dtype), w_flat,
                preferred_element_type=jnp.float32)                  # (Bt*T, Cout)
    y = jnp.maximum(y * scale + shift, 0.0)                          # f32 epilogue
    return y.reshape(bt, t, cout)


def tempcnn_fused_kernel(kernel_size,
                         x_ref,
                         w1_ref, s1_ref, b1_ref,
                         w2_ref, s2_ref, b2_ref,
                         w3_ref, s3_ref, b3_ref,
                         wd_ref, sd_ref, bd_ref,
                         wo_ref, bo_ref,
                         out_ref):
    # --- three Conv1d + BN + ReLU blocks (Dropout = identity in eval) ------
    h = _conv_bn_relu(x_ref[...], w1_ref[...], s1_ref[...], b1_ref[...], kernel_size)
    h = _conv_bn_relu(h, w2_ref[...], s2_ref[...], b2_ref[...], kernel_size)
    h = _conv_bn_relu(h, w3_ref[...], s3_ref[...], b3_ref[...], kernel_size)

    # --- flatten + Linear + BN + ReLU as ONE deep matmul ---------------------
    # wd_ref is (T*H, Dout) with row index t*H + c (PyTorch's (B, C, T) flatten
    # order absorbed host-side), so flattening the native (B, T, H) activation
    # along lanes needs no runtime transpose.
    bt, t, hdim = h.shape
    hflat = jnp.concatenate([h[:, i, :] for i in range(t)], axis=-1)  # (Bt, T*H)
    hd = jnp.dot(hflat.astype(wd_ref.dtype), wd_ref[...],
                 preferred_element_type=jnp.float32)                  # (Bt, Dout)
    hd = jnp.maximum(hd * sd_ref[...] + bd_ref[...], 0.0)

    # --- final Linear (lane-padded to 128 classes) + LogSoftmax --------------
    logits = jnp.dot(hd.astype(wo_ref.dtype), wo_ref[...],
                     preferred_element_type=jnp.float32) + bo_ref[...]
    m = jnp.max(logits, axis=-1, keepdims=True)
    zc = logits - m
    lse = jnp.log(jnp.sum(jnp.exp(zc), axis=-1, keepdims=True))
    out_ref[...] = zc - lse


# ---------------------------------------------------------------------------
# Wrapper
# ---------------------------------------------------------------------------
def tempcnn_forward(x, params, kernel_size, b_tile=None):
    """x: (B, T, D) channels-last (same data the PyTorch model receives)."""
    assert kernel_size % 2 == 1, "'same' conv path assumes odd kernel_size (as in TempCNN)"
    B, T, D = x.shape
    ncls = params["num_classes"]
    ncls_pad = params["out_w"].shape[1]

    if b_tile is None:
        # Fill >=256 MXU rows per push (v6e/v7x; >=128 on v5e comes for free)
        # and keep the (b_tile, 128) output block sublane-aligned when tiling.
        b_tile = _round_up(max(1, pl.cdiv(256, T)), 8)
        if b_tile >= B:
            b_tile = B
    bp = pl.cdiv(B, b_tile) * b_tile
    xp = x if bp == B else jnp.concatenate(
        [x, jnp.zeros((bp - B, T, D), x.dtype)], axis=0)

    weight_names = ("conv1_w", "conv1_scale", "conv1_shift",
                    "conv2_w", "conv2_scale", "conv2_shift",
                    "conv3_w", "conv3_scale", "conv3_shift",
                    "dense_w", "dense_scale", "dense_shift",
                    "out_w", "out_b")
    weights = [params[k] for k in weight_names]

    def resident(a):  # whole array in VMEM, same block every grid step
        return pl.BlockSpec(tuple(a.shape), lambda i, n=a.ndim: (0,) * n)

    out = pl.pallas_call(
        functools.partial(tempcnn_fused_kernel, kernel_size),
        out_shape=jax.ShapeDtypeStruct((bp, ncls_pad), jnp.float32),
        grid=(bp // b_tile,),
        in_specs=[pl.BlockSpec((b_tile, T, D), lambda i: (i, 0, 0))]
                 + [resident(w) for w in weights],
        out_specs=pl.BlockSpec((b_tile, ncls_pad), lambda i: (i, 0)),
        compiler_params=pltpu.CompilerParams(
            dimension_semantics=("parallel",)),  # v7x: batch tiles over 2 TCs
    )(xp, *weights)
    return out[:B, :ncls]


# ---------------------------------------------------------------------------
# Parameter setup (deterministic, synthetic) in PyTorch layouts, then
# trace-time re-plumbing into kernel-friendly layouts.
# ---------------------------------------------------------------------------
def fold_bn(bias, gamma, beta, mean, var, eps=1e-5):
    scale = gamma / jnp.sqrt(var + eps)
    shift = (bias - mean) * scale + beta
    return (scale.reshape(1, -1).astype(jnp.float32),
            shift.reshape(1, -1).astype(jnp.float32))


def make_params(key, input_dim, seq_len, kernel_size, hidden_dims, num_classes):
    assert kernel_size % 2 == 1
    keys = iter(jax.random.split(key, 40))
    p = {"num_classes": num_classes}
    cin = input_dim
    for i in range(1, 4):
        # PyTorch Conv1d weight layout (Cout, Cin, K) -> im2col (K*Cin, Cout),
        # row index = k*Cin + c.
        w_pt = 0.1 * jax.random.normal(next(keys), (hidden_dims, cin, kernel_size),
                                       jnp.float32)
        w_flat = jnp.transpose(w_pt, (2, 1, 0)).reshape(kernel_size * cin, hidden_dims)
        b = 0.1 * jax.random.normal(next(keys), (hidden_dims,), jnp.float32)
        gamma = 1.0 + 0.1 * jax.random.normal(next(keys), (hidden_dims,), jnp.float32)
        beta = 0.1 * jax.random.normal(next(keys), (hidden_dims,), jnp.float32)
        mean = 0.1 * jax.random.normal(next(keys), (hidden_dims,), jnp.float32)
        var = jax.random.uniform(next(keys), (hidden_dims,), jnp.float32, 0.5, 1.5)
        scale, shift = fold_bn(b, gamma, beta, mean, var)
        p[f"conv{i}_w"] = w_flat.astype(MXU_DTYPE)
        p[f"conv{i}_scale"], p[f"conv{i}_shift"] = scale, shift
        cin = hidden_dims

    d_in = hidden_dims * seq_len
    d_out = 4 * hidden_dims
    # PyTorch Linear weight (Dout, Din) with Din index = c*T + t (flatten of
    # (B, C, T)).  Re-plumbed to (T*H, Dout) with row index t*H + c so the
    # kernel contracts the native (B, T*H) activation in a single matmul.
    wd_pt = 0.05 * jax.random.normal(next(keys), (d_out, d_in), jnp.float32)
    wd = jnp.transpose(wd_pt.reshape(d_out, hidden_dims, seq_len),
                       (2, 1, 0)).reshape(seq_len * hidden_dims, d_out)
    b = 0.1 * jax.random.normal(next(keys), (d_out,), jnp.float32)
    gamma = 1.0 + 0.1 * jax.random.normal(next(keys), (d_out,), jnp.float32)
    beta = 0.1 * jax.random.normal(next(keys), (d_out,), jnp.float32)
    mean = 0.1 * jax.random.normal(next(keys), (d_out,), jnp.float32)
    var = jax.random.uniform(next(keys), (d_out,), jnp.float32, 0.5, 1.5)
    p["dense_w"] = wd.astype(MXU_DTYPE)
    p["dense_scale"], p["dense_shift"] = fold_bn(b, gamma, beta, mean, var)

    # Final Linear: PyTorch (num_classes, Dout).  Lane-pad classes to a multiple
    # of 128 (zero weight columns, -1e9 bias) so the kernel's output store is an
    # unmasked lane-dense vst; padded columns contribute exp(-1e9)=0 to the
    # log-softmax and are sliced away in the wrapper.
    ncls_pad = pl.cdiv(num_classes, 128) * 128
    wo_pt = 0.1 * jax.random.normal(next(keys), (num_classes, d_out), jnp.float32)
    wo = jnp.zeros((d_out, ncls_pad), jnp.float32).at[:, :num_classes].set(wo_pt.T)
    p["out_w"] = wo.astype(MXU_DTYPE)
    bo_real = 0.1 * jax.random.normal(next(keys), (num_classes,), jnp.float32)
    bo = jnp.full((ncls_pad,), -1e9, jnp.float32).at[:num_classes].set(bo_real)
    p["out_b"] = bo.reshape(1, -1)
    return p


# TODO(synk): training-mode Dropout and batch-statistic BatchNorm are not
# implemented; this reproduces eval-mode forward semantics only.

if __name__ == "__main__":
    B, T, D = 2, 16, 4            # batch, sequencelength, input_dim
    H, K, NCLS = 32, 7, 5         # hidden_dims, kernel_size, num_classes

    root = jax.random.PRNGKey(0)
    kx, kp = jax.random.split(root)
    x = jax.random.normal(kx, (B, T, D), jnp.float32)
    params = make_params(kp, D, T, K, H, NCLS)

    out = jax.block_until_ready(tempcnn_forward(x, params, K))

    assert out.shape == (B, NCLS)
    assert bool(jnp.all(jnp.isfinite(out)))
    # log-softmax rows must exponentiate-sum to 1
    assert bool(jnp.allclose(jnp.sum(jnp.exp(out), axis=-1), 1.0, atol=1e-4))

    print("KERNEL_OK")
</pallas_src>

<mosaic_0001>
module attributes {stable_mosaic.version = 11 : i64} {
  func.func @tempcnn_fused_kernel(%arg0: i32, %arg1: memref<2x16x4xf32, #tpu.memory_space<vmem>>, %arg2: memref<28x32xbf16, #tpu.memory_space<vmem>>, %arg3: memref<1x32xf32, #tpu.memory_space<vmem>>, %arg4: memref<1x32xf32, #tpu.memory_space<vmem>>, %arg5: memref<224x32xbf16, #tpu.memory_space<vmem>>, %arg6: memref<1x32xf32, #tpu.memory_space<vmem>>, %arg7: memref<1x32xf32, #tpu.memory_space<vmem>>, %arg8: memref<224x32xbf16, #tpu.memory_space<vmem>>, %arg9: memref<1x32xf32, #tpu.memory_space<vmem>>, %arg10: memref<1x32xf32, #tpu.memory_space<vmem>>, %arg11: memref<512x128xbf16, #tpu.memory_space<vmem>>, %arg12: memref<1x128xf32, #tpu.memory_space<vmem>>, %arg13: memref<1x128xf32, #tpu.memory_space<vmem>>, %arg14: memref<128x128xbf16, #tpu.memory_space<vmem>>, %arg15: memref<1x128xf32, #tpu.memory_space<vmem>>, %arg16: memref<2x128xf32, #tpu.memory_space<vmem>>) attributes {dimension_semantics = [#tpu.dimension_semantics<parallel>], iteration_bounds = array<i64: 1>, scalar_prefetch = 0 : i64, scratch_operands = 0 : i64, tpu.core_type = #tpu.core_type<tc>, window_params = [{transform_indices = @transform_0, window_bounds = array<i64: 2, 16, 4>}, {pipeline_mode = #tpu.pipeline_mode<synchronous>, transform_indices = @transform_1, window_bounds = array<i64: 28, 32>}, {pipeline_mode = #tpu.pipeline_mode<synchronous>, transform_indices = @transform_2, window_bounds = array<i64: 1, 32>}, {pipeline_mode = #tpu.pipeline_mode<synchronous>, transform_indices = @transform_3, window_bounds = array<i64: 1, 32>}, {pipeline_mode = #tpu.pipeline_mode<synchronous>, transform_indices = @transform_4, window_bounds = array<i64: 224, 32>}, {pipeline_mode = #tpu.pipeline_mode<synchronous>, transform_indices = @transform_5, window_bounds = array<i64: 1, 32>}, {pipeline_mode = #tpu.pipeline_mode<synchronous>, transform_indices = @transform_6, window_bounds = array<i64: 1, 32>}, {pipeline_mode = #tpu.pipeline_mode<synchronous>, transform_indices = @transform_7, window_bounds = array<i64: 224, 32>}, {pipeline_mode = #tpu.pipeline_mode<synchronous>, transform_indices = @transform_8, window_bounds = array<i64: 1, 32>}, {pipeline_mode = #tpu.pipeline_mode<synchronous>, transform_indices = @transform_9, window_bounds = array<i64: 1, 32>}, {pipeline_mode = #tpu.pipeline_mode<synchronous>, transform_indices = @transform_10, window_bounds = array<i64: 512, 128>}, {pipeline_mode = #tpu.pipeline_mode<synchronous>, transform_indices = @transform_11, window_bounds = array<i64: 1, 128>}, {pipeline_mode = #tpu.pipeline_mode<synchronous>, transform_indices = @transform_12, window_bounds = array<i64: 1, 128>}, {pipeline_mode = #tpu.pipeline_mode<synchronous>, transform_indices = @transform_13, window_bounds = array<i64: 128, 128>}, {pipeline_mode = #tpu.pipeline_mode<synchronous>, transform_indices = @transform_14, window_bounds = array<i64: 1, 128>}, {transform_indices = @transform_15, window_bounds = array<i64: 2, 128>}]} {
    %c0 = arith.constant 0 : index
    %c0_0 = arith.constant 0 : index
    %c0_1 = arith.constant 0 : index
    %0 = vector.load %arg1[%c0, %c0_0, %c0_1] : memref<2x16x4xf32, #tpu.memory_space<vmem>>, vector<2x16x4xf32>
    %c0_2 = arith.constant 0 : index
    %c0_3 = arith.constant 0 : index
    %1 = vector.load %arg2[%c0_2, %c0_3] : memref<28x32xbf16, #tpu.memory_space<vmem>>, vector<28x32xbf16>
    %c0_4 = arith.constant 0 : index
    %c0_5 = arith.constant 0 : index
    %2 = vector.load %arg3[%c0_4, %c0_5] : memref<1x32xf32, #tpu.memory_space<vmem>>, vector<1x32xf32>
    %c0_6 = arith.constant 0 : index
    %c0_7 = arith.constant 0 : index
    %3 = vector.load %arg4[%c0_6, %c0_7] : memref<1x32xf32, #tpu.memory_space<vmem>>, vector<1x32xf32>
    %cst = arith.constant 0.000000e+00 : f32
    %4 = vector.broadcast %cst : f32 to vector<2x3x4xf32>
    %cst_8 = arith.constant 0.000000e+00 : f32
    %5 = vector.broadcast %cst_8 : f32 to vector<2x5x4xf32>
    %6 = tpu.concatenate %4, %0, %5 in 1 : vector<2x3x4xf32>, vector<2x16x4xf32>, vector<2x5x4xf32> -> vector<2x24x4xf32>
    %7 = vector.extract_strided_slice %6 {offsets = [0, 0, 0], sizes = [2, 16, 4], strides = [1, 1, 1]} : vector<2x24x4xf32> to vector<2x16x4xf32>
    %8 = vector.extract_strided_slice %6 {offsets = [0, 1, 0], sizes = [2, 16, 4], strides = [1, 1, 1]} : vector<2x24x4xf32> to vector<2x16x4xf32>
    %9 = vector.extract_strided_slice %6 {offsets = [0, 2, 0], sizes = [2, 16, 4], strides = [1, 1, 1]} : vector<2x24x4xf32> to vector<2x16x4xf32>
    %10 = vector.extract_strided_slice %6 {offsets = [0, 3, 0], sizes = [2, 16, 4], strides = [1, 1, 1]} : vector<2x24x4xf32> to vector<2x16x4xf32>
    %11 = vector.extract_strided_slice %6 {offsets = [0, 4, 0], sizes = [2, 16, 4], strides = [1, 1, 1]} : vector<2x24x4xf32> to vector<2x16x4xf32>
    %12 = vector.extract_strided_slice %6 {offsets = [0, 5, 0], sizes = [2, 16, 4], strides = [1, 1, 1]} : vector<2x24x4xf32> to vector<2x16x4xf32>
    %13 = vector.extract_strided_slice %6 {offsets = [0, 6, 0], sizes = [2, 16, 4], strides = [1, 1, 1]} : vector<2x24x4xf32> to vector<2x16x4xf32>
    %14 = tpu.concatenate %7, %8, %9, %10, %11, %12, %13 in 2 : vector<2x16x4xf32>, vector<2x16x4xf32>, vector<2x16x4xf32>, vector<2x16x4xf32>, vector<2x16x4xf32>, vector<2x16x4xf32>, vector<2x16x4xf32> -> vector<2x16x28xf32>
    %15 = vector.shape_cast %14 : vector<2x16x28xf32> to vector<32x28xf32>
    %16 = arith.truncf %15 : vector<32x28xf32> to vector<32x28xbf16>
    %cst_9 = arith.constant dense<0.000000e+00> : vector<32x32xf32>
    %17 = tpu.matmul %16, %1, %cst_9 {dimension_numbers = #tpu.dot_dimension_numbers<[1], [0], [0], [1], [0, 0, 1, 1], [], []>} : vector<32x28xbf16>, vector<28x32xbf16>, vector<32x32xf32> -> vector<32x32xf32>
    %18 = vector.broadcast %2 : vector<1x32xf32> to vector<32x32xf32>
    %19 = arith.mulf %17, %18 : vector<32x32xf32>
    %20 = vector.broadcast %3 : vector<1x32xf32> to vector<32x32xf32>
    %21 = arith.addf %19, %20 : vector<32x32xf32>
    %cst_10 = arith.constant 0.000000e+00 : f32
    %22 = vector.broadcast %cst_10 : f32 to vector<32x32xf32>
    %23 = arith.maximumf %21, %22 : vector<32x32xf32>
    %24 = vector.shape_cast %23 : vector<32x32xf32> to vector<2x16x32xf32>
    %c0_11 = arith.constant 0 : index
    %c0_12 = arith.constant 0 : index
    %25 = vector.load %arg5[%c0_11, %c0_12] : memref<224x32xbf16, #tpu.memory_space<vmem>>, vector<224x32xbf16>
    %c0_13 = arith.constant 0 : index
    %c0_14 = arith.constant 0 : index
    %26 = vector.load %arg6[%c0_13, %c0_14] : memref<1x32xf32, #tpu.memory_space<vmem>>, vector<1x32xf32>
    %c0_15 = arith.constant 0 : index
    %c0_16 = arith.constant 0 : index
    %27 = vector.load %arg7[%c0_15, %c0_16] : memref<1x32xf32, #tpu.memory_space<vmem>>, vector<1x32xf32>
    %cst_17 = arith.constant 0.000000e+00 : f32
    %28 = vector.broadcast %cst_17 : f32 to vector<2x3x32xf32>
    %cst_18 = arith.constant 0.000000e+00 : f32
    %29 = vector.broadcast %cst_18 : f32 to vector<2x5x32xf32>
    %30 = tpu.concatenate %28, %24, %29 in 1 : vector<2x3x32xf32>, vector<2x16x32xf32>, vector<2x5x32xf32> -> vector<2x24x32xf32>
    %31 = vector.extract_strided_slice %30 {offsets = [0, 0, 0], sizes = [2, 16, 32], strides = [1, 1, 1]} : vector<2x24x32xf32> to vector<2x16x32xf32>
    %32 = vector.extract_strided_slice %30 {offsets = [0, 1, 0], sizes = [2, 16, 32], strides = [1, 1, 1]} : vector<2x24x32xf32> to vector<2x16x32xf32>
    %33 = vector.extract_strided_slice %30 {offsets = [0, 2, 0], sizes = [2, 16, 32], strides = [1, 1, 1]} : vector<2x24x32xf32> to vector<2x16x32xf32>
    %34 = vector.extract_strided_slice %30 {offsets = [0, 3, 0], sizes = [2, 16, 32], strides = [1, 1, 1]} : vector<2x24x32xf32> to vector<2x16x32xf32>
    %35 = vector.extract_strided_slice %30 {offsets = [0, 4, 0], sizes = [2, 16, 32], strides = [1, 1, 1]} : vector<2x24x32xf32> to vector<2x16x32xf32>
    %36 = vector.extract_strided_slice %30 {offsets = [0, 5, 0], sizes = [2, 16, 32], strides = [1, 1, 1]} : vector<2x24x32xf32> to vector<2x16x32xf32>
    %37 = vector.extract_strided_slice %30 {offsets = [0, 6, 0], sizes = [2, 16, 32], strides = [1, 1, 1]} : vector<2x24x32xf32> to vector<2x16x32xf32>
    %38 = tpu.concatenate %31, %32, %33, %34, %35, %36, %37 in 2 : vector<2x16x32xf32>, vector<2x16x32xf32>, vector<2x16x32xf32>, vector<2x16x32xf32>, vector<2x16x32xf32>, vector<2x16x32xf32>, vector<2x16x32xf32> -> vector<2x16x224xf32>
    %39 = vector.shape_cast %38 : vector<2x16x224xf32> to vector<32x224xf32>
    %40 = arith.truncf %39 : vector<32x224xf32> to vector<32x224xbf16>
    %cst_19 = arith.constant dense<0.000000e+00> : vector<32x32xf32>
    %41 = tpu.matmul %40, %25, %cst_19 {dimension_numbers = #tpu.dot_dimension_numbers<[1], [0], [0], [1], [0, 0, 1, 1], [], []>} : vector<32x224xbf16>, vector<224x32xbf16>, vector<32x32xf32> -> vector<32x32xf32>
    %42 = vector.broadcast %26 : vector<1x32xf32> to vector<32x32xf32>
    %43 = arith.mulf %41, %42 : vector<32x32xf32>
    %44 = vector.broadcast %27 : vector<1x32xf32> to vector<32x32xf32>
    %45 = arith.addf %43, %44 : vector<32x32xf32>
    %cst_20 = arith.constant 0.000000e+00 : f32
    %46 = vector.broadcast %cst_20 : f32 to vector<32x32xf32>
    %47 = arith.maximumf %45, %46 : vector<32x32xf32>
    %48 = vector.shape_cast %47 : vector<32x32xf32> to vector<2x16x32xf32>
    %c0_21 = arith.constant 0 : index
    %c0_22 = arith.constant 0 : index
    %49 = vector.load %arg8[%c0_21, %c0_22] : memref<224x32xbf16, #tpu.memory_space<vmem>>, vector<224x32xbf16>
    %c0_23 = arith.constant 0 : index
    %c0_24 = arith.constant 0 : index
    %50 = vector.load %arg9[%c0_23, %c0_24] : memref<1x32xf32, #tpu.memory_space<vmem>>, vector<1x32xf32>
    %c0_25 = arith.constant 0 : index
    %c0_26 = arith.constant 0 : index
    %51 = vector.load %arg10[%c0_25, %c0_26] : memref<1x32xf32, #tpu.memory_space<vmem>>, vector<1x32xf32>
    %cst_27 = arith.constant 0.000000e+00 : f32
    %52 = vector.broadcast %cst_27 : f32 to vector<2x3x32xf32>
    %cst_28 = arith.constant 0.000000e+00 : f32
    %53 = vector.broadcast %cst_28 : f32 to vector<2x5x32xf32>
    %54 = tpu.concatenate %52, %48, %53 in 1 : vector<2x3x32xf32>, vector<2x16x32xf32>, vector<2x5x32xf32> -> vector<2x24x32xf32>
    %55 = vector.extract_strided_slice %54 {offsets = [0, 0, 0], sizes = [2, 16, 32], strides = [1, 1, 1]} : vector<2x24x32xf32> to vector<2x16x32xf32>
    %56 = vector.extract_strided_slice %54 {offsets = [0, 1, 0], sizes = [2, 16, 32], strides = [1, 1, 1]} : vector<2x24x32xf32> to vector<2x16x32xf32>
    %57 = vector.extract_strided_slice %54 {offsets = [0, 2, 0], sizes = [2, 16, 32], strides = [1, 1, 1]} : vector<2x24x32xf32> to vector<2x16x32xf32>
    %58 = vector.extract_strided_slice %54 {offsets = [0, 3, 0], sizes = [2, 16, 32], strides = [1, 1, 1]} : vector<2x24x32xf32> to vector<2x16x32xf32>
    %59 = vector.extract_strided_slice %54 {offsets = [0, 4, 0], sizes = [2, 16, 32], strides = [1, 1, 1]} : vector<2x24x32xf32> to vector<2x16x32xf32>
    %60 = vector.extract_strided_slice %54 {offsets = [0, 5, 0], sizes = [2, 16, 32], strides = [1, 1, 1]} : vector<2x24x32xf32> to vector<2x16x32xf32>
    %61 = vector.extract_strided_slice %54 {offsets = [0, 6, 0], sizes = [2, 16, 32], strides = [1, 1, 1]} : vector<2x24x32xf32> to vector<2x16x32xf32>
    %62 = tpu.concatenate %55, %56, %57, %58, %59, %60, %61 in 2 : vector<2x16x32xf32>, vector<2x16x32xf32>, vector<2x16x32xf32>, vector<2x16x32xf32>, vector<2x16x32xf32>, vector<2x16x32xf32>, vector<2x16x32xf32> -> vector<2x16x224xf32>
    %63 = vector.shape_cast %62 : vector<2x16x224xf32> to vector<32x224xf32>
    %64 = arith.truncf %63 : vector<32x224xf32> to vector<32x224xbf16>
    %cst_29 = arith.constant dense<0.000000e+00> : vector<32x32xf32>
    %65 = tpu.matmul %64, %49, %cst_29 {dimension_numbers = #tpu.dot_dimension_numbers<[1], [0], [0], [1], [0, 0, 1, 1], [], []>} : vector<32x224xbf16>, vector<224x32xbf16>, vector<32x32xf32> -> vector<32x32xf32>
    %66 = vector.broadcast %50 : vector<1x32xf32> to vector<32x32xf32>
    %67 = arith.mulf %65, %66 : vector<32x32xf32>
    %68 = vector.broadcast %51 : vector<1x32xf32> to vector<32x32xf32>
    %69 = arith.addf %67, %68 : vector<32x32xf32>
    %cst_30 = arith.constant 0.000000e+00 : f32
    %70 = vector.broadcast %cst_30 : f32 to vector<32x32xf32>
    %71 = arith.maximumf %69, %70 : vector<32x32xf32>
    %72 = vector.shape_cast %71 : vector<32x32xf32> to vector<2x16x32xf32>
    %73 = vector.extract_strided_slice %72 {offsets = [0, 0, 0], sizes = [2, 1, 32], strides = [1, 1, 1]} : vector<2x16x32xf32> to vector<2x1x32xf32>
    %74 = vector.shape_cast %73 : vector<2x1x32xf32> to vector<2x32xf32>
    %75 = vector.extract_strided_slice %72 {offsets = [0, 1, 0], sizes = [2, 1, 32], strides = [1, 1, 1]} : vector<2x16x32xf32> to vector<2x1x32xf32>
    %76 = vector.shape_cast %75 : vector<2x1x32xf32> to vector<2x32xf32>
    %77 = vector.extract_strided_slice %72 {offsets = [0, 2, 0], sizes = [2, 1, 32], strides = [1, 1, 1]} : vector<2x16x32xf32> to vector<2x1x32xf32>
    %78 = vector.shape_cast %77 : vector<2x1x32xf32> to vector<2x32xf32>
    %79 = vector.extract_strided_slice %72 {offsets = [0, 3, 0], sizes = [2, 1, 32], strides = [1, 1, 1]} : vector<2x16x32xf32> to vector<2x1x32xf32>
    %80 = vector.shape_cast %79 : vector<2x1x32xf32> to vector<2x32xf32>
    %81 = vector.extract_strided_slice %72 {offsets = [0, 4, 0], sizes = [2, 1, 32], strides = [1, 1, 1]} : vector<2x16x32xf32> to vector<2x1x32xf32>
    %82 = vector.shape_cast %81 : vector<2x1x32xf32> to vector<2x32xf32>
    %83 = vector.extract_strided_slice %72 {offsets = [0, 5, 0], sizes = [2, 1, 32], strides = [1, 1, 1]} : vector<2x16x32xf32> to vector<2x1x32xf32>
    %84 = vector.shape_cast %83 : vector<2x1x32xf32> to vector<2x32xf32>
    %85 = vector.extract_strided_slice %72 {offsets = [0, 6, 0], sizes = [2, 1, 32], strides = [1, 1, 1]} : vector<2x16x32xf32> to vector<2x1x32xf32>
    %86 = vector.shape_cast %85 : vector<2x1x32xf32> to vector<2x32xf32>
    %87 = vector.extract_strided_slice %72 {offsets = [0, 7, 0], sizes = [2, 1, 32], strides = [1, 1, 1]} : vector<2x16x32xf32> to vector<2x1x32xf32>
    %88 = vector.shape_cast %87 : vector<2x1x32xf32> to vector<2x32xf32>
    %89 = vector.extract_strided_slice %72 {offsets = [0, 8, 0], sizes = [2, 1, 32], strides = [1, 1, 1]} : vector<2x16x32xf32> to vector<2x1x32xf32>
    %90 = vector.shape_cast %89 : vector<2x1x32xf32> to vector<2x32xf32>
    %91 = vector.extract_strided_slice %72 {offsets = [0, 9, 0], sizes = [2, 1, 32], strides = [1, 1, 1]} : vector<2x16x32xf32> to vector<2x1x32xf32>
    %92 = vector.shape_cast %91 : vector<2x1x32xf32> to vector<2x32xf32>
    %93 = vector.extract_strided_slice %72 {offsets = [0, 10, 0], sizes = [2, 1, 32], strides = [1, 1, 1]} : vector<2x16x32xf32> to vector<2x1x32xf32>
    %94 = vector.shape_cast %93 : vector<2x1x32xf32> to vector<2x32xf32>
    %95 = vector.extract_strided_slice %72 {offsets = [0, 11, 0], sizes = [2, 1, 32], strides = [1, 1, 1]} : vector<2x16x32xf32> to vector<2x1x32xf32>
    %96 = vector.shape_cast %95 : vector<2x1x32xf32> to vector<2x32xf32>
    %97 = vector.extract_strided_slice %72 {offsets = [0, 12, 0], sizes = [2, 1, 32], strides = [1, 1, 1]} : vector<2x16x32xf32> to vector<2x1x32xf32>
    %98 = vector.shape_cast %97 : vector<2x1x32xf32> to vector<2x32xf32>
    %99 = vector.extract_strided_slice %72 {offsets = [0, 13, 0], sizes = [2, 1, 32], strides = [1, 1, 1]} : vector<2x16x32xf32> to vector<2x1x32xf32>
    %100 = vector.shape_cast %99 : vector<2x1x32xf32> to vector<2x32xf32>
    %101 = vector.extract_strided_slice %72 {offsets = [0, 14, 0], sizes = [2, 1, 32], strides = [1, 1, 1]} : vector<2x16x32xf32> to vector<2x1x32xf32>
    %102 = vector.shape_cast %101 : vector<2x1x32xf32> to vector<2x32xf32>
    %103 = vector.extract_strided_slice %72 {offsets = [0, 15, 0], sizes = [2, 1, 32], strides = [1, 1, 1]} : vector<2x16x32xf32> to vector<2x1x32xf32>
    %104 = vector.shape_cast %103 : vector<2x1x32xf32> to vector<2x32xf32>
    %105 = tpu.concatenate %74, %76, %78, %80, %82, %84, %86, %88, %90, %92, %94, %96, %98, %100, %102, %104 in 1 : vector<2x32xf32>, vector<2x32xf32>, vector<2x32xf32>, vector<2x32xf32>, vector<2x32xf32>, vector<2x32xf32>, vector<2x32xf32>, vector<2x32xf32>, vector<2x32xf32>, vector<2x32xf32>, vector<2x32xf32>, vector<2x32xf32>, vector<2x32xf32>, vector<2x32xf32>, vector<2x32xf32>, vector<2x32xf32> -> vector<2x512xf32>
    %106 = arith.truncf %105 : vector<2x512xf32> to vector<2x512xbf16>
    %c0_31 = arith.constant 0 : index
    %c0_32 = arith.constant 0 : index
    %107 = vector.load %arg11[%c0_31, %c0_32] : memref<512x128xbf16, #tpu.memory_space<vmem>>, vector<512x128xbf16>
    %cst_33 = arith.constant dense<0.000000e+00> : vector<2x128xf32>
    %108 = tpu.matmul %106, %107, %cst_33 {dimension_numbers = #tpu.dot_dimension_numbers<[1], [0], [0], [1], [0, 0, 1, 1], [], []>} : vector<2x512xbf16>, vector<512x128xbf16>, vector<2x128xf32> -> vector<2x128xf32>
    %c0_34 = arith.constant 0 : index
    %c0_35 = arith.constant 0 : index
    %109 = vector.load %arg12[%c0_34, %c0_35] : memref<1x128xf32, #tpu.memory_space<vmem>>, vector<1x128xf32>
    %110 = vector.broadcast %109 : vector<1x128xf32> to vector<2x128xf32>
    %111 = arith.mulf %108, %110 : vector<2x128xf32>
    %c0_36 = arith.constant 0 : index
    %c0_37 = arith.constant 0 : index
    %112 = vector.load %arg13[%c0_36, %c0_37] : memref<1x128xf32, #tpu.memory_space<vmem>>, vector<1x128xf32>
    %113 = vector.broadcast %112 : vector<1x128xf32> to vector<2x128xf32>
    %114 = arith.addf %111, %113 : vector<2x128xf32>
    %cst_38 = arith.constant 0.000000e+00 : f32
    %115 = vector.broadcast %cst_38 : f32 to vector<2x128xf32>
    %116 = arith.maximumf %114, %115 : vector<2x128xf32>
    %117 = arith.truncf %116 : vector<2x128xf32> to vector<2x128xbf16>
    %c0_39 = arith.constant 0 : index
    %c0_40 = arith.constant 0 : index
    %118 = vector.load %arg14[%c0_39, %c0_40] : memref<128x128xbf16, #tpu.memory_space<vmem>>, vector<128x128xbf16>
    %cst_41 = arith.constant dense<0.000000e+00> : vector<2x128xf32>
    %119 = tpu.matmul %117, %118, %cst_41 {dimension_numbers = #tpu.dot_dimension_numbers<[1], [0], [0], [1], [0, 0, 1, 1], [], []>} : vector<2x128xbf16>, vector<128x128xbf16>, vector<2x128xf32> -> vector<2x128xf32>
    %c0_42 = arith.constant 0 : index
    %c0_43 = arith.constant 0 : index
    %120 = vector.load %arg15[%c0_42, %c0_43] : memref<1x128xf32, #tpu.memory_space<vmem>>, vector<1x128xf32>
    %121 = vector.broadcast %120 : vector<1x128xf32> to vector<2x128xf32>
    %122 = arith.addf %119, %121 : vector<2x128xf32>
    %cst_44 = arith.constant dense<0xFF800000> : vector<2xf32>
    %123 = vector.multi_reduction <maximumf>, %122, %cst_44 [1] : vector<2x128xf32> to vector<2xf32>
    %124 = vector.shape_cast %123 : vector<2xf32> to vector<2x1xf32>
    %125 = vector.broadcast %124 : vector<2x1xf32> to vector<2x128xf32>
    %126 = arith.subf %122, %125 : vector<2x128xf32>
    %127 = math.exp %126 : vector<2x128xf32>
    %cst_45 = arith.constant dense<0.000000e+00> : vector<2xf32>
    %128 = vector.multi_reduction <add>, %127, %cst_45 [1] : vector<2x128xf32> to vector<2xf32>
    %129 = vector.shape_cast %128 : vector<2xf32> to vector<2x1xf32>
    %130 = math.log %129 : vector<2x1xf32>
    %131 = vector.broadcast %130 : vector<2x1xf32> to vector<2x128xf32>
    %132 = arith.subf %126, %131 : vector<2x128xf32>
    %c0_46 = arith.constant 0 : index
    %c0_47 = arith.constant 0 : index
    %133 = vector.load %arg16[%c0_46, %c0_47] : memref<2x128xf32, #tpu.memory_space<vmem>>, vector<2x128xf32>
    tpu.vector_store %arg16[%c0_46, %c0_47], %132 {strides = array<i32>} : memref<2x128xf32, #tpu.memory_space<vmem>>, vector<2x128xf32>,
    return
  }
  func.func @transform_0(%arg0: i32) -> (i32, i32, i32) {
    %c0_i32 = arith.constant 0 : i32
    %c0_i32_0 = arith.constant 0 : i32
    %c0_i32_1 = arith.constant 0 : i32
    return %arg0, %c0_i32, %c0_i32_0 : i32, i32, i32
  }
  func.func @transform_1(%arg0: i32) -> (i32, i32) {
    %c0_i32 = arith.constant 0 : i32
    %c0_i32_0 = arith.constant 0 : i32
    %c0_i32_1 = arith.constant 0 : i32
    return %c0_i32, %c0_i32_0 : i32, i32
  }
  func.func @transform_2(%arg0: i32) -> (i32, i32) {
    %c0_i32 = arith.constant 0 : i32
    %c0_i32_0 = arith.constant 0 : i32
    %c0_i32_1 = arith.constant 0 : i32
    return %c0_i32, %c0_i32_0 : i32, i32
  }
  func.func @transform_3(%arg0: i32) -> (i32, i32) {
    %c0_i32 = arith.constant 0 : i32
    %c0_i32_0 = arith.constant 0 : i32
    %c0_i32_1 = arith.constant 0 : i32
    return %c0_i32, %c0_i32_0 : i32, i32
  }
  func.func @transform_4(%arg0: i32) -> (i32, i32) {
    %c0_i32 = arith.constant 0 : i32
    %c0_i32_0 = arith.constant 0 : i32
    %c0_i32_1 = arith.constant 0 : i32
    return %c0_i32, %c0_i32_0 : i32, i32
  }
  func.func @transform_5(%arg0: i32) -> (i32, i32) {
    %c0_i32 = arith.constant 0 : i32
    %c0_i32_0 = arith.constant 0 : i32
    %c0_i32_1 = arith.constant 0 : i32
    return %c0_i32, %c0_i32_0 : i32, i32
  }
  func.func @transform_6(%arg0: i32) -> (i32, i32) {
    %c0_i32 = arith.constant 0 : i32
    %c0_i32_0 = arith.constant 0 : i32
    %c0_i32_1 = arith.constant 0 : i32
    return %c0_i32, %c0_i32_0 : i32, i32
  }
  func.func @transform_7(%arg0: i32) -> (i32, i32) {
    %c0_i32 = arith.constant 0 : i32
    %c0_i32_0 = arith.constant 0 : i32
    %c0_i32_1 = arith.constant 0 : i32
    return %c0_i32, %c0_i32_0 : i32, i32
  }
  func.func @transform_8(%arg0: i32) -> (i32, i32) {
    %c0_i32 = arith.constant 0 : i32
    %c0_i32_0 = arith.constant 0 : i32
    %c0_i32_1 = arith.constant 0 : i32
    return %c0_i32, %c0_i32_0 : i32, i32
  }
  func.func @transform_9(%arg0: i32) -> (i32, i32) {
    %c0_i32 = arith.constant 0 : i32
    %c0_i32_0 = arith.constant 0 : i32
    %c0_i32_1 = arith.constant 0 : i32
    return %c0_i32, %c0_i32_0 : i32, i32
  }
  func.func @transform_10(%arg0: i32) -> (i32, i32) {
    %c0_i32 = arith.constant 0 : i32
    %c0_i32_0 = arith.constant 0 : i32
    %c0_i32_1 = arith.constant 0 : i32
    return %c0_i32, %c0_i32_0 : i32, i32
  }
  func.func @transform_11(%arg0: i32) -> (i32, i32) {
    %c0_i32 = arith.constant 0 : i32
    %c0_i32_0 = arith.constant 0 : i32
    %c0_i32_1 = arith.constant 0 : i32
    return %c0_i32, %c0_i32_0 : i32, i32
  }
  func.func @transform_12(%arg0: i32) -> (i32, i32) {
    %c0_i32 = arith.constant 0 : i32
    %c0_i32_0 = arith.constant 0 : i32
    %c0_i32_1 = arith.constant 0 : i32
    return %c0_i32, %c0_i32_0 : i32, i32
  }
  func.func @transform_13(%arg0: i32) -> (i32, i32) {
    %c0_i32 = arith.constant 0 : i32
    %c0_i32_0 = arith.constant 0 : i32
    %c0_i32_1 = arith.constant 0 : i32
    return %c0_i32, %c0_i32_0 : i32, i32
  }
  func.func @transform_14(%arg0: i32) -> (i32, i32) {
    %c0_i32 = arith.constant 0 : i32
    %c0_i32_0 = arith.constant 0 : i32
    %c0_i32_1 = arith.constant 0 : i32
    return %c0_i32, %c0_i32_0 : i32, i32
  }
  func.func @transform_15(%arg0: i32) -> (i32, i32) {
    %c0_i32 = arith.constant 0 : i32
    %c0_i32_0 = arith.constant 0 : i32
    return %arg0, %c0_i32 : i32, i32
  }
}

</mosaic_0001>

<llo_original>
// kernel: tpu_custom_call.1
$region0: #{tpu_custom_call.1}
  #allocation0 [shape = 'u32[]', space=smem, size = 0x4, offset = 0x4, fixed_abs, tag = 'smem constant byte address 0x4 - core index']
  #allocation1 [shape = 'u32[72,128]{1,0:T(1,128)}', space=vmem, size = 0x9000, scoped, tag = 'internal scratch']
  %s0 = inlined_call_operand.vmem [shape: f32[2,16,4], index: 0, kind: input, shape index: {}]
  %s1 = inlined_call_operand.hbm [shape: bf16[28,32], index: 1, kind: input, shape index: {}]
  %s2 = inlined_call_operand.vmem [shape: f32[1,32], index: 2, kind: input, shape index: {}]
  %s3 = inlined_call_operand.vmem [shape: f32[1,32], index: 3, kind: input, shape index: {}]
  %s4 = inlined_call_operand.vmem [shape: bf16[224,32], index: 4, kind: input, shape index: {}]
  %s5 = inlined_call_operand.vmem [shape: f32[1,32], index: 5, kind: input, shape index: {}]
  %s6 = inlined_call_operand.vmem [shape: f32[1,32], index: 6, kind: input, shape index: {}]
  %s7 = inlined_call_operand.vmem [shape: bf16[224,32], index: 7, kind: input, shape index: {}]
  %s8 = inlined_call_operand.vmem [shape: f32[1,32], index: 8, kind: input, shape index: {}]
  %s9 = inlined_call_operand.vmem [shape: f32[1,32], index: 9, kind: input, shape index: {}]
  %s10 = inlined_call_operand.vmem [shape: bf16[512,128], index: 10, kind: input, shape index: {}]
  %s11 = inlined_call_operand.vmem [shape: f32[1,128], index: 11, kind: input, shape index: {}]
  %s12 = inlined_call_operand.vmem [shape: f32[1,128], index: 12, kind: input, shape index: {}]
  %s13 = inlined_call_operand.hbm [shape: bf16[128,128], index: 13, kind: input, shape index: {}]
  %s14 = inlined_call_operand.vmem [shape: f32[1,128], index: 14, kind: input, shape index: {}]
  %s15 = inlined_call_operand.hbm [shape: f32[2,128], index: 15, kind: output, shape index: {}]
  %s16 = sld [smem:[#allocation0]]
  $region78: #{tpu_custom_call.1} parent=0
    _
  %s18 = ssub.s32 1, %s16
  %s19 = scalar_select 0, %s18, %s16
  $region1: #{tpu_custom_call.1} parent=0
    #allocation2 [shape = 'u8[8192]{0}', space=vmem, size = 0x2000, scoped, tag = 'input window, operand 1, single buffered']
    #allocation3 [shape = 's32[1]{0}', space=sflag, size = 0x4, scoped, tag = 'scoped memory for tpu_custom_call.1']
    #allocation4 [shape = 's32[1]{0}', space=sflag, size = 0x4, scoped, tag = 'scoped memory for tpu_custom_call.1']
    #allocation5 [shape = 'u8[32768]{0}', space=vmem, size = 0x8000, scoped, tag = 'input window, operand 13, single buffered']
    #allocation6 [shape = 's32[1]{0}', space=sflag, size = 0x4, scoped, tag = 'scoped memory for tpu_custom_call.1']
    #allocation7 [shape = 'u8[1024]{0}', space=vmem, size = 0x400, scoped, tag = 'output window, operand 0, single buffered']
    %20 = vsyncpa [#allocation3], 0
    %21 = vsyncpa [#allocation6], 0
    %22 = vsyncpa [#allocation4], 0
    // Predicated region
    $region2: #{tpu_custom_call.1} parent=1 // pred_check
      _
    $region3: #{tpu_custom_call.1} parent=1 // pred_check_branch
      %24 = sbr.rel (0) target = $region5
    $region4: #{tpu_custom_call.1} parent=1 // pred_region
      _
    $region5: #{tpu_custom_call.1} parent=1 // pred_fallthru
      _
    // Predicated region
    $region6: #{tpu_custom_call.1} parent=1 // pred_check
      _
    $region7: #{tpu_custom_call.1} parent=1 // pred_check_branch
      %26 = sbr.rel (0) target = $region9
    $region8: #{tpu_custom_call.1} parent=1 // pred_region
      %28 = vsyncadd [#allocation3], 0
      %s29 = sshll.u32 %s1, 4
      %s30 = int_to_ptr.hbm [resolvable:$true] %s29
      %s31 = sshll.u32 [#allocation2], 4
      %s32 = int_to_ptr.vmem [resolvable:$true] %s31
      %37 = dma.hbm_to_vmem [thread:$0]  %s30, 256, %s32, [#allocation3], 64, 64, 4
    $region9: #{tpu_custom_call.1} parent=1 // pred_fallthru
      _
    // Predicated region
    $region10: #{tpu_custom_call.1} parent=1 // pred_check
      _
    $region11: #{tpu_custom_call.1} parent=1 // pred_check_branch
      %39 = sbr.rel (0) target = $region13
    $region12: #{tpu_custom_call.1} parent=1 // pred_region
      _
    $region13: #{tpu_custom_call.1} parent=1 // pred_fallthru
      _
    // Predicated region
    $region14: #{tpu_custom_call.1} parent=1 // pred_check
      _
    $region15: #{tpu_custom_call.1} parent=1 // pred_check_branch
      %41 = sbr.rel (0) target = $region17
    $region16: #{tpu_custom_call.1} parent=1 // pred_region
      _
    $region17: #{tpu_custom_call.1} parent=1 // pred_fallthru
      _
    // Predicated region
    $region18: #{tpu_custom_call.1} parent=1 // pred_check
      _
    $region19: #{tpu_custom_call.1} parent=1 // pred_check_branch
      %43 = sbr.rel (0) target = $region21
    $region20: #{tpu_custom_call.1} parent=1 // pred_region
      _
    $region21: #{tpu_custom_call.1} parent=1 // pred_fallthru
      _
    // Predicated region
    $region22: #{tpu_custom_call.1} parent=1 // pred_check
      _
    $region23: #{tpu_custom_call.1} parent=1 // pred_check_branch
      %45 = sbr.rel (0) target = $region25
    $region24: #{tpu_custom_call.1} parent=1 // pred_region
      _
    $region25: #{tpu_custom_call.1} parent=1 // pred_fallthru
      _
    // Predicated region
    $region26: #{tpu_custom_call.1} parent=1 // pred_check
      _
    $region27: #{tpu_custom_call.1} parent=1 // pred_check_branch
      %47 = sbr.rel (0) target = $region29
    $region28: #{tpu_custom_call.1} parent=1 // pred_region
      _
    $region29: #{tpu_custom_call.1} parent=1 // pred_fallthru
      _
    // Predicated region
    $region30: #{tpu_custom_call.1} parent=1 // pred_check
      _
    $region31: #{tpu_custom_call.1} parent=1 // pred_check_branch
      %49 = sbr.rel (0) target = $region33
    $region32: #{tpu_custom_call.1} parent=1 // pred_region
      _
    $region33: #{tpu_custom_call.1} parent=1 // pred_fallthru
      _
    // Predicated region
    $region34: #{tpu_custom_call.1} parent=1 // pred_check
      _
    $region35: #{tpu_custom_call.1} parent=1 // pred_check_branch
      %51 = sbr.rel (0) target = $region37
    $region36: #{tpu_custom_call.1} parent=1 // pred_region
      _
    $region37: #{tpu_custom_call.1} parent=1 // pred_fallthru
      _
    // Predicated region
    $region38: #{tpu_custom_call.1} parent=1 // pred_check
      _
    $region39: #{tpu_custom_call.1} parent=1 // pred_check_branch
      %53 = sbr.rel (0) target = $region41
    $region40: #{tpu_custom_call.1} parent=1 // pred_region
      _
    $region41: #{tpu_custom_call.1} parent=1 // pred_fallthru
      _
    // Predicated region
    $region42: #{tpu_custom_call.1} parent=1 // pred_check
      _
    $region43: #{tpu_custom_call.1} parent=1 // pred_check_branch
      %55 = sbr.rel (0) target = $region45
    $region44: #{tpu_custom_call.1} parent=1 // pred_region
      _
    $region45: #{tpu_custom_call.1} parent=1 // pred_fallthru
      _
    // Predicated region
    $region46: #{tpu_custom_call.1} parent=1 // pred_check
      _
    $region47: #{tpu_custom_call.1} parent=1 // pred_check_branch
      %57 = sbr.rel (0) target = $region49
    $region48: #{tpu_custom_call.1} parent=1 // pred_region
      _
    $region49: #{tpu_custom_call.1} parent=1 // pred_fallthru
      _
    // Predicated region
    $region50: #{tpu_custom_call.1} parent=1 // pred_check
      _
    $region51: #{tpu_custom_call.1} parent=1 // pred_check_branch
      %59 = sbr.rel (0) target = $region53
    $region52: #{tpu_custom_call.1} parent=1 // pred_region
      _
    $region53: #{tpu_custom_call.1} parent=1 // pred_fallthru
      _
    // Predicated region
    $region54: #{tpu_custom_call.1} parent=1 // pred_check
      _
    $region55: #{tpu_custom_call.1} parent=1 // pred_check_branch
      %61 = sbr.rel (0) target = $region57
    $region56: #{tpu_custom_call.1} parent=1 // pred_region
      %63 = vsyncadd [#allocation6], 0
      %s64 = sshll.u32 %s13, 4
      %s65 = int_to_ptr.hbm [resolvable:$true] %s64
      %s66 = sshll.u32 [#allocation5], 4
      %s67 = int_to_ptr.vmem [resolvable:$true] %s66
      %72 = dma.hbm_to_vmem [thread:$0]  %s65, 1024, %s67, [#allocation6], 64, 64, 4
    $region57: #{tpu_custom_call.1} parent=1 // pred_fallthru
      _
    // Predicated region
    $region58: #{tpu_custom_call.1} parent=1 // pred_check
      _
    $region59: #{tpu_custom_call.1} parent=1 // pred_check_branch
      %74 = sbr.rel (0) target = $region61
    $region60: #{tpu_custom_call.1} parent=1 // pred_region
      _
    $region61: #{tpu_custom_call.1} parent=1 // pred_fallthru
      _
    // Predicated region
    $region62: #{tpu_custom_call.1} parent=1 // pred_check
      _
    $region63: #{tpu_custom_call.1} parent=1 // pred_check_branch
      %76 = sbr.rel (0) target = $region65
    $region64: #{tpu_custom_call.1} parent=1 // pred_region
      %78 = dma.done [#allocation3], 256
    $region65: #{tpu_custom_call.1} parent=1 // pred_fallthru
      _
    // Predicated region
    $region66: #{tpu_custom_call.1} parent=1 // pred_check
      _
    $region67: #{tpu_custom_call.1} parent=1 // pred_check_branch
      %80 = sbr.rel (0) target = $region69
    $region68: #{tpu_custom_call.1} parent=1 // pred_region
      %82 = dma.done [#allocation6], 1024
    $region69: #{tpu_custom_call.1} parent=1 // pred_fallthru
      _
    %v84 = vld [vmem:[%s0] sm:$0xff]
    %v85 = vld [vmem:[%s0 + $0x8] sm:$0xff]
    %v86 = vld [vmem:[%s0 + $0x10] sm:$0xff]
    %v87 = vld [vmem:[%s0 + $0x18] sm:$0xff]
    %v88 = vld [vmem:[#allocation2] sm:$0xf]
    %v89 = vld [vmem:[#allocation2 + $0x4] sm:$0xf]
    %v90 = vld [vmem:[#allocation2 + $0x8] sm:$0xf]
    %v91 = vld [vmem:[#allocation2 + $0xc] sm:$0x3]
    %v92 = vld [vmem:[%s2] sm:$0x1]
    %v93 = vld [vmem:[%s3] sm:$0x1]
    %vm98 = vcmask 1042432
    %v99 = vrot.slane %v84, 5
    %v100 = vrot.slane %v85, 5
    %v101 = vsel %vm98, %v99, %v100
    %v102 = vrot.slane %v86, 5
    %v103 = vrot.slane %v87, 5
    %v104 = vsel %vm98, %v102, %v103
    %v111 = vsel %vm98, 0.0, %v99
    %v112 = vsel %vm98, 0.0, %v102
    %v113 = vsel %vm98, %v100, 0.0
    %v114 = vsel %vm98, %v103, 0.0
    %vm119 = vcmask 1046528
    %v120 = vrot.slane %v111, 1
    %v121 = vrot.slane %v101, 1
    %v122 = vsel %vm119, %v120, %v121
    %v123 = vrot.slane %v113, 1
    %v124 = vsel %vm119, %v121, %v123
    %v125 = vrot.slane %v112, 1
    %v126 = vrot.slane %v104, 1
    %v127 = vsel %vm119, %v125, %v126
    %v128 = vrot.slane %v114, 1
    %v129 = vsel %vm119, %v126, %v128
    %130 = vrot.lane.b32.xlu0 %v122, 4
    %v131 = vpop.permute.xlu0 %130
    %132 = vrot.lane.b32.xlu0 %v124, 4
    %v133 = vpop.permute.xlu0 %132
    %134 = vrot.lane.b32.xlu0 %v127, 4
    %v135 = vpop.permute.xlu0 %134
    %136 = vrot.lane.b32.xlu0 %v129, 4
    %v137 = vpop.permute.xlu0 %136
    %vm142 = vcmask 1045504
    %v143 = vrot.slane %v111, 2
    %v144 = vrot.slane %v101, 2
    %v145 = vsel %vm142, %v143, %v144
    %v146 = vrot.slane %v113, 2
    %v147 = vsel %vm142, %v144, %v146
    %v148 = vrot.slane %v112, 2
    %v149 = vrot.slane %v104, 2
    %v150 = vsel %vm142, %v148, %v149
    %v151 = vrot.slane %v114, 2
    %v152 = vsel %vm142, %v149, %v151
    %153 = vrot.lane.b32.xlu0 %v145, 8
    %v154 = vpop.permute.xlu0 %153
    %155 = vrot.lane.b32.xlu0 %v147, 8
    %v156 = vpop.permute.xlu0 %155
    %157 = vrot.lane.b32.xlu0 %v150, 8
    %v158 = vpop.permute.xlu0 %157
    %159 = vrot.lane.b32.xlu0 %v152, 8
    %v160 = vpop.permute.xlu0 %159
    %vm165 = vcmask 1044480
    %v166 = vrot.slane %v111, 3
    %v167 = vrot.slane %v101, 3
    %v168 = vsel %vm165, %v166, %v167
    %v169 = vrot.slane %v113, 3
    %v170 = vsel %vm165, %v167, %v169
    %v171 = vrot.slane %v112, 3
    %v172 = vrot.slane %v104, 3
    %v173 = vsel %vm165, %v171, %v172
    %v174 = vrot.slane %v114, 3
    %v175 = vsel %vm165, %v172, %v174
    %176 = vrot.lane.b32.xlu0 %v168, 12
    %v177 = vpop.permute.xlu0 %176
    %178 = vrot.lane.b32.xlu0 %v170, 12
    %v179 = vpop.permute.xlu0 %178
    %180 = vrot.lane.b32.xlu0 %v173, 12
    %v181 = vpop.permute.xlu0 %180
    %182 = vrot.lane.b32.xlu0 %v175, 12
    %v183 = vpop.permute.xlu0 %182
    %vm188 = vcmask 1043456
    %v189 = vrot.slane %v111, 4
    %v190 = vrot.slane %v101, 4
    %v191 = vsel %vm188, %v189, %v190
    %v192 = vrot.slane %v113, 4
    %v193 = vsel %vm188, %v190, %v192
    %v194 = vrot.slane %v112, 4
    %v195 = vrot.slane %v104, 4
    %v196 = vsel %vm188, %v194, %v195
    %v197 = vrot.slane %v114, 4
    %v198 = vsel %vm188, %v195, %v197
    %199 = vrot.lane.b32.xlu0 %v191, 16
    %v200 = vpop.permute.xlu0 %199
    %201 = vrot.lane.b32.xlu0 %v193, 16
    %v202 = vpop.permute.xlu0 %201
    %203 = vrot.lane.b32.xlu0 %v196, 16
    %v204 = vpop.permute.xlu0 %203
    %205 = vrot.lane.b32.xlu0 %v198, 16
    %v206 = vpop.permute.xlu0 %205
    %v211 = vrot.slane %v111, 5
    %v212 = vrot.slane %v101, 5
    %v213 = vsel %vm98, %v211, %v212
    %v214 = vrot.slane %v113, 5
    %v215 = vsel %vm98, %v212, %v214
    %v216 = vrot.slane %v112, 5
    %v217 = vrot.slane %v104, 5
    %v218 = vsel %vm98, %v216, %v217
    %v219 = vrot.slane %v114, 5
    %v220 = vsel %vm98, %v217, %v219
    %221 = vrot.lane.b32.xlu0 %v213, 20
    %v222 = vpop.permute.xlu0 %221
    %223 = vrot.lane.b32.xlu0 %v215, 20
    %v224 = vpop.permute.xlu0 %223
    %225 = vrot.lane.b32.xlu0 %v218, 20
    %v226 = vpop.permute.xlu0 %225
    %227 = vrot.lane.b32.xlu0 %v220, 20
    %v228 = vpop.permute.xlu0 %227
    %vm233 = vcmask 1041408
    %v234 = vrot.slane %v111, 6
    %v235 = vrot.slane %v101, 6
    %v236 = vsel %vm233, %v234, %v235
    %v237 = vrot.slane %v113, 6
    %v238 = vsel %vm233, %v235, %v237
    %v239 = vrot.slane %v112, 6
    %v240 = vrot.slane %v104, 6
    %v241 = vsel %vm233, %v239, %v240
    %v242 = vrot.slane %v114, 6
    %v243 = vsel %vm233, %v240, %v242
    %244 = vrot.lane.b32.xlu0 %v236, 24
    %v245 = vpop.permute.xlu0 %244
    %246 = vrot.lane.b32.xlu0 %v238, 24
    %v247 = vpop.permute.xlu0 %246
    %248 = vrot.lane.b32.xlu0 %v241, 24
    %v249 = vpop.permute.xlu0 %248
    %250 = vrot.lane.b32.xlu0 %v243, 24
    %v251 = vpop.permute.xlu0 %250
    %vm256 = vcmask 31744
    %v257 = vsel %vm256, %v111, %v131
    %v258 = vsel %vm256, %v101, %v133
    %v259 = vsel %vm256, %v112, %v135
    %v260 = vsel %vm256, %v104, %v137
    %vm261 = vcmask 64512
    %v262 = vsel %vm261, %v257, %v154
    %v263 = vsel %vm261, %v258, %v156
    %v264 = vsel %vm261, %v259, %v158
    %v265 = vsel %vm261, %v260, %v160
    %vm266 = vcmask 97280
    %v267 = vsel %vm266, %v262, %v177
    %v268 = vsel %vm266, %v263, %v179
    %v269 = vsel %vm266, %v264, %v181
    %v270 = vsel %vm266, %v265, %v183
    %vm271 = vcmask 130048
    %v272 = vsel %vm271, %v267, %v200
    %v273 = vsel %vm271, %v268, %v202
    %v274 = vsel %vm271, %v269, %v204
    %v275 = vsel %vm271, %v270, %v206
    %vm276 = vcmask 162816
    %v277 = vsel %vm276, %v272, %v222
    %v278 = vsel %vm276, %v273, %v224
    %v279 = vsel %vm276, %v274, %v226
    %v280 = vsel %vm276, %v275, %v228
    %vm281 = vcmask 195584
    %v282 = vsel %vm281, %v277, %v245
    %v283 = vsel %vm281, %v278, %v247
    %v284 = vsel %vm281, %v279, %v249
    %v285 = vsel %vm281, %v280, %v251
    %v286 = vpack.c.bf16 %v283, %v282
    %v287 = vpack.c.bf16 %v285, %v284
    %v292 = vunpack.c.l.b16 %v88
    %v293 = vunpack.c.l.b16 %v89
    %v294 = vunpack.c.l.b16 %v90
    %v295 = vunpack.c.l.b16 %v91
    %v296 = vpack.c.b16 %v293, %v292
    %v297 = vpack.c.b16 %v295, %v294
    %vm299 = vcmask 228352
    %v301 = vsel %vm299, %v286, 0
    %v304 = vsel %vm299, %v287, 0
    %v307 = vsel %vm142, %v297, 0
    %309 = vmatpush.bf16.msra.mxu0 0
    %310 = vmatpush.bf16.msra.mxu0 0
    %311 = vmatpush.bf16.msra.mxu0 0
    %312 = vmatpush.bf16.msra.mxu0 0
    %313 = vmatpush.bf16.msra.mxu0 0
    %314 = vmatpush.bf16.msra.mxu0 0
    %315 = vmatpush.bf16.msra.mxu0 %v307
    %316 = vmatpush.bf16.msra.mxu0 %v296
    %317 = vmatmul.bf16.gmra.mxu0 %v301
    %v318 = vpop.f32.mrf.mxu0
    %v319 = vadd.f32 0.0, %v318
    %v320 = vpop.f32.mrf.mxu0
    %v321 = vadd.f32 0.0, %v320
    %322 = vmatmul.bf16.gmra.mxu0 %v304
    %v323 = vpop.f32.mrf.mxu0
    %v324 = vadd.f32 0.0, %v323
    %v325 = vpop.f32.mrf.mxu0
    %v326 = vadd.f32 0.0, %v325
    %327 = vdwg.mxu0
    %v329 = vperm.slane %v92, 0
    %v331 = vmul.f32 %v319, %v329
    %v332 = vmul.f32 %v321, %v329
    %v333 = vmul.f32 %v324, %v329
    %v334 = vmul.f32 %v326, %v329
    %v336 = vperm.slane %v93, 0
    %v338 = vadd.f32 %v331, %v336
    %v339 = vadd.f32 %v332, %v336
    %v340 = vadd.f32 %v333, %v336
    %v341 = vadd.f32 %v334, %v336
    %v342 = vmax.f32 %v338, 0.0
    %v343 = vmax.f32 %v339, 0.0
    %v344 = vmax.f32 %v340, 0.0
    %v345 = vmax.f32 %v341, 0.0
    %v346 = vld [vmem:[%s4] sm:$0xf]
    %v347 = vld [vmem:[%s4 + $0x4] sm:$0xf]
    %v348 = vld [vmem:[%s4 + $0x8] sm:$0xf]
    %v349 = vld [vmem:[%s4 + $0xc] sm:$0xf]
    %v350 = vld [vmem:[%s4 + $0x10] sm:$0xf]
    %v351 = vld [vmem:[%s4 + $0x14] sm:$0xf]
    %v352 = vld [vmem:[%s4 + $0x18] sm:$0xf]
    %v353 = vld [vmem:[%s4 + $0x1c] sm:$0xf]
    %v354 = vld [vmem:[%s4 + $0x20] sm:$0xf]
    %v355 = vld [vmem:[%s4 + $0x24] sm:$0xf]
    %v356 = vld [vmem:[%s4 + $0x28] sm:$0xf]
    %v357 = vld [vmem:[%s4 + $0x2c] sm:$0xf]
    %v358 = vld [vmem:[%s4 + $0x30] sm:$0xf]
    %v359 = vld [vmem:[%s4 + $0x34] sm:$0xf]
    %v360 = vld [vmem:[%s4 + $0x38] sm:$0xf]
    %v361 = vld [vmem:[%s4 + $0x3c] sm:$0xf]
    %v362 = vld [vmem:[%s4 + $0x40] sm:$0xf]
    %v363 = vld [vmem:[%s4 + $0x44] sm:$0xf]
    %v364 = vld [vmem:[%s4 + $0x48] sm:$0xf]
    %v365 = vld [vmem:[%s4 + $0x4c] sm:$0xf]
    %v366 = vld [vmem:[%s4 + $0x50] sm:$0xf]
    %v367 = vld [vmem:[%s4 + $0x54] sm:$0xf]
    %v368 = vld [vmem:[%s4 + $0x58] sm:$0xf]
    %v369 = vld [vmem:[%s4 + $0x5c] sm:$0xf]
    %v370 = vld [vmem:[%s4 + $0x60] sm:$0xf]
    %v371 = vld [vmem:[%s4 + $0x64] sm:$0xf]
    %v372 = vld [vmem:[%s4 + $0x68] sm:$0xf]
    %v373 = vld [vmem:[%s4 + $0x6c] sm:$0xf]
    %v374 = vld [vmem:[%s5] sm:$0x1]
    %v375 = vld [vmem:[%s6] sm:$0x1]
    %v380 = vrot.slane %v342, 5
    %v381 = vrot.slane %v343, 5
    %v382 = vsel %vm98, %v380, %v381
    %v383 = vrot.slane %v344, 5
    %v384 = vrot.slane %v345, 5
    %v385 = vsel %vm98, %v383, %v384
    %v392 = vsel %vm98, 0.0, %v380
    %v393 = vsel %vm98, 0.0, %v383
    %v394 = vsel %vm98, %v381, 0.0
    %v395 = vsel %vm98, %v384, 0.0
    %v400 = vrot.slane %v392, 1
    %v401 = vrot.slane %v382, 1
    %v402 = vsel %vm119, %v400, %v401
    %v403 = vrot.slane %v394, 1
    %v404 = vsel %vm119, %v401, %v403
    %v405 = vrot.slane %v393, 1
    %v406 = vrot.slane %v385, 1
    %v407 = vsel %vm119, %v405, %v406
    %v408 = vrot.slane %v395, 1
    %v409 = vsel %vm119, %v406, %v408
    %410 = vrot.lane.b32.xlu0 %v402, 32
    %v411 = vpop.permute.xlu0 %410
    %412 = vrot.lane.b32.xlu0 %v404, 32
    %v413 = vpop.permute.xlu0 %412
    %414 = vrot.lane.b32.xlu0 %v407, 32
    %v415 = vpop.permute.xlu0 %414
    %416 = vrot.lane.b32.xlu0 %v409, 32
    %v417 = vpop.permute.xlu0 %416
    %v422 = vrot.slane %v392, 2
    %v423 = vrot.slane %v382, 2
    %v424 = vsel %vm142, %v422, %v423
    %v425 = vrot.slane %v394, 2
    %v426 = vsel %vm142, %v423, %v425
    %v427 = vrot.slane %v393, 2
    %v428 = vrot.slane %v385, 2
    %v429 = vsel %vm142, %v427, %v428
    %v430 = vrot.slane %v395, 2
    %v431 = vsel %vm142, %v428, %v430
    %432 = vrot.lane.b32.xlu0 %v424, 64
    %v433 = vpop.permute.xlu0 %432
    %434 = vrot.lane.b32.xlu0 %v426, 64
    %v435 = vpop.permute.xlu0 %434
    %436 = vrot.lane.b32.xlu0 %v429, 64
    %v437 = vpop.permute.xlu0 %436
    %438 = vrot.lane.b32.xlu0 %v431, 64
    %v439 = vpop.permute.xlu0 %438
    %v444 = vrot.slane %v392, 3
    %v445 = vrot.slane %v382, 3
    %v446 = vsel %vm165, %v444, %v445
    %v447 = vrot.slane %v394, 3
    %v448 = vsel %vm165, %v445, %v447
    %v449 = vrot.slane %v393, 3
    %v450 = vrot.slane %v385, 3
    %v451 = vsel %vm165, %v449, %v450
    %v452 = vrot.slane %v395, 3
    %v453 = vsel %vm165, %v450, %v452
    %454 = vrot.lane.b32.xlu0 %v446, 96
    %v455 = vpop.permute.xlu0 %454
    %456 = vrot.lane.b32.xlu0 %v448, 96
    %v457 = vpop.permute.xlu0 %456
    %458 = vrot.lane.b32.xlu0 %v451, 96
    %v459 = vpop.permute.xlu0 %458
    %460 = vrot.lane.b32.xlu0 %v453, 96
    %v461 = vpop.permute.xlu0 %460
    %v466 = vrot.slane %v392, 4
    %v467 = vrot.slane %v382, 4
    %v468 = vsel %vm188, %v466, %v467
    %v469 = vrot.slane %v394, 4
    %v470 = vsel %vm188, %v467, %v469
    %v471 = vrot.slane %v393, 4
    %v472 = vrot.slane %v385, 4
    %v473 = vsel %vm188, %v471, %v472
    %v474 = vrot.slane %v395, 4
    %v475 = vsel %vm188, %v472, %v474
    %v480 = vrot.slane %v392, 5
    %v481 = vrot.slane %v382, 5
    %v482 = vsel %vm98, %v480, %v481
    %v483 = vrot.slane %v394, 5
    %v484 = vsel %vm98, %v481, %v483
    %v485 = vrot.slane %v393, 5
    %v486 = vrot.slane %v385, 5
    %v487 = vsel %vm98, %v485, %v486
    %v488 = vrot.slane %v395, 5
    %v489 = vsel %vm98, %v486, %v488
    %490 = vrot.lane.b32.xlu0 %v482, 32
    %v491 = vpop.permute.xlu0 %490
    %492 = vrot.lane.b32.xlu0 %v484, 32
    %v493 = vpop.permute.xlu0 %492
    %494 = vrot.lane.b32.xlu0 %v487, 32
    %v495 = vpop.permute.xlu0 %494
    %496 = vrot.lane.b32.xlu0 %v489, 32
    %v497 = vpop.permute.xlu0 %496
    %v502 = vrot.slane %v392, 6
    %v503 = vrot.slane %v382, 6
    %v504 = vsel %vm233, %v502, %v503
    %v505 = vrot.slane %v394, 6
    %v506 = vsel %vm233, %v503, %v505
    %v507 = vrot.slane %v393, 6
    %v508 = vrot.slane %v385, 6
    %v509 = vsel %vm233, %v507, %v508
    %v510 = vrot.slane %v395, 6
    %v511 = vsel %vm233, %v508, %v510
    %512 = vrot.lane.b32.xlu0 %v504, 64
    %v513 = vpop.permute.xlu0 %512
    %514 = vrot.lane.b32.xlu0 %v506, 64
    %v515 = vpop.permute.xlu0 %514
    %516 = vrot.lane.b32.xlu0 %v509, 64
    %v517 = vpop.permute.xlu0 %516
    %518 = vrot.lane.b32.xlu0 %v511, 64
    %v519 = vpop.permute.xlu0 %518
    %vm524 = vcmask 261120
    %v525 = vsel %vm524, %v392, %v411
    %v526 = vsel %vm524, %v382, %v413
    %v527 = vsel %vm524, %v393, %v415
    %v528 = vsel %vm524, %v385, %v417
    %vm529 = vcmask 523264
    %v530 = vsel %vm529, %v525, %v433
    %v531 = vsel %vm529, %v526, %v435
    %v532 = vsel %vm529, %v527, %v437
    %v533 = vsel %vm529, %v528, %v439
    %vm534 = vcmask 785408
    %v535 = vsel %vm534, %v530, %v455
    %v536 = vsel %vm534, %v531, %v457
    %v537 = vsel %vm534, %v532, %v459
    %v538 = vsel %vm534, %v533, %v461
    %v539 = vsel %vm524, %v468, %v491
    %v540 = vsel %vm524, %v470, %v493
    %v541 = vsel %vm524, %v473, %v495
    %v542 = vsel %vm524, %v475, %v497
    %v543 = vsel %vm529, %v539, %v513
    %v544 = vsel %vm529, %v540, %v515
    %v545 = vsel %vm529, %v541, %v517
    %v546 = vsel %vm529, %v542, %v519
    %v547 = vpack.c.bf16 %v536, %v535
    %v548 = vpack.c.bf16 %v544, %v543
    %v549 = vpack.c.bf16 %v538, %v537
    %v550 = vpack.c.bf16 %v546, %v545
    %v579 = vunpack.c.l.b16 %v346
    %v580 = vunpack.c.l.b16 %v347
    %v581 = vunpack.c.l.b16 %v348
    %v582 = vunpack.c.l.b16 %v349
    %v583 = vunpack.c.l.b16 %v350
    %v584 = vunpack.c.l.b16 %v351
    %v585 = vunpack.c.l.b16 %v352
    %v586 = vunpack.c.l.b16 %v353
    %v587 = vunpack.c.l.b16 %v354
    %v588 = vunpack.c.l.b16 %v355
    %v589 = vunpack.c.l.b16 %v356
    %v590 = vunpack.c.l.b16 %v357
    %v591 = vunpack.c.l.b16 %v358
    %v592 = vunpack.c.l.b16 %v359
    %v593 = vunpack.c.l.b16 %v360
    %v594 = vunpack.c.l.b16 %v361
    %v595 = vunpack.c.l.b16 %v362
    %v596 = vunpack.c.l.b16 %v363
    %v597 = vunpack.c.l.b16 %v364
    %v598 = vunpack.c.l.b16 %v365
    %v599 = vunpack.c.l.b16 %v366
    %v600 = vunpack.c.l.b16 %v367
    %v601 = vunpack.c.l.b16 %v368
    %v602 = vunpack.c.l.b16 %v369
    %v603 = vunpack.c.l.b16 %v370
    %v604 = vunpack.c.l.b16 %v371
    %v605 = vunpack.c.l.b16 %v372
    %v606 = vunpack.c.l.b16 %v373
    %v607 = vpack.c.b16 %v580, %v579
    %v608 = vpack.c.b16 %v582, %v581
    %v609 = vpack.c.b16 %v584, %v583
    %v610 = vpack.c.b16 %v586, %v585
    %v611 = vpack.c.b16 %v588, %v587
    %v612 = vpack.c.b16 %v590, %v589
    %v613 = vpack.c.b16 %v592, %v591
    %v614 = vpack.c.b16 %v594, %v593
    %v615 = vpack.c.b16 %v596, %v595
    %v616 = vpack.c.b16 %v598, %v597
    %v617 = vpack.c.b16 %v600, %v599
    %v618 = vpack.c.b16 %v602, %v601
    %v619 = vpack.c.b16 %v604, %v603
    %v620 = vpack.c.b16 %v606, %v605
    %v636 = vsel %vm534, %v548, 0
    %v639 = vsel %vm534, %v550, 0
    %641 = vmatpush.bf16.msra.mxu0 %v614
    %642 = vmatpush.bf16.msra.mxu0 %v613
    %643 = vmatpush.bf16.msra.mxu0 %v612
    %644 = vmatpush.bf16.msra.mxu0 %v611
    %645 = vmatpush.bf16.msra.mxu0 %v610
    %646 = vmatpush.bf16.msra.mxu0 %v609
    %647 = vmatpush.bf16.msra.mxu0 %v608
    %648 = vmatpush.bf16.msra.mxu0 %v607
    %649 = vmatmul.bf16.gmra.mxu0 %v547
    %v650 = vpop.f32.mrf.mxu0
    %v651 = vadd.f32 0.0, %v650
    %v652 = vpop.f32.mrf.mxu0
    %v653 = vadd.f32 0.0, %v652
    %654 = vmatmul.bf16.gmra.mxu0 %v549
    %v655 = vpop.f32.mrf.mxu0
    %v656 = vadd.f32 0.0, %v655
    %v657 = vpop.f32.mrf.mxu0
    %v658 = vadd.f32 0.0, %v657
    %659 = vdwg.mxu0
    %660 = vmatpush.bf16.msra.mxu0 0
    %661 = vmatpush.bf16.msra.mxu0 0
    %662 = vmatpush.bf16.msra.mxu0 %v620
    %663 = vmatpush.bf16.msra.mxu0 %v619
    %664 = vmatpush.bf16.msra.mxu0 %v618
    %665 = vmatpush.bf16.msra.mxu0 %v617
    %666 = vmatpush.bf16.msra.mxu0 %v616
    %667 = vmatpush.bf16.msra.mxu0 %v615
    %668 = vmatmul.bf16.gmra.mxu0 %v636
    %v669 = vpop.f32.mrf.mxu0
    %v670 = vadd.f32 %v651, %v669
    %v671 = vpop.f32.mrf.mxu0
    %v672 = vadd.f32 %v653, %v671
    %673 = vmatmul.bf16.gmra.mxu0 %v639
    %v674 = vpop.f32.mrf.mxu0
    %v675 = vadd.f32 %v656, %v674
    %v676 = vpop.f32.mrf.mxu0
    %v677 = vadd.f32 %v658, %v676
    %678 = vdwg.mxu0
    %v680 = vperm.slane %v374, 0
    %v682 = vmul.f32 %v670, %v680
    %v683 = vmul.f32 %v672, %v680
    %v684 = vmul.f32 %v675, %v680
    %v685 = vmul.f32 %v677, %v680
    %v687 = vperm.slane %v375, 0
    %v689 = vadd.f32 %v682, %v687
    %v690 = vadd.f32 %v683, %v687
    %v691 = vadd.f32 %v684, %v687
    %v692 = vadd.f32 %v685, %v687
    %v693 = vmax.f32 %v689, 0.0
    %v694 = vmax.f32 %v690, 0.0
    %v695 = vmax.f32 %v691, 0.0
    %v696 = vmax.f32 %v692, 0.0
    %v697 = vld [vmem:[%s7] sm:$0xf]
    %v698 = vld [vmem:[%s7 + $0x4] sm:$0xf]
    %v699 = vld [vmem:[%s7 + $0x8] sm:$0xf]
    %v700 = vld [vmem:[%s7 + $0xc] sm:$0xf]
    %v701 = vld [vmem:[%s7 + $0x10] sm:$0xf]
    %v702 = vld [vmem:[%s7 + $0x14] sm:$0xf]
    %v703 = vld [vmem:[%s7 + $0x18] sm:$0xf]
    %v704 = vld [vmem:[%s7 + $0x1c] sm:$0xf]
    %v705 = vld [vmem:[%s7 + $0x20] sm:$0xf]
    %v706 = vld [vmem:[%s7 + $0x24] sm:$0xf]
    %v707 = vld [vmem:[%s7 + $0x28] sm:$0xf]
    %v708 = vld [vmem:[%s7 + $0x2c] sm:$0xf]
    %v709 = vld [vmem:[%s7 + $0x30] sm:$0xf]
    %v710 = vld [vmem:[%s7 + $0x34] sm:$0xf]
    %v711 = vld [vmem:[%s7 + $0x38] sm:$0xf]
    %v712 = vld [vmem:[%s7 + $0x3c] sm:$0xf]
    %v713 = vld [vmem:[%s7 + $0x40] sm:$0xf]
    %v714 = vld [vmem:[%s7 + $0x44] sm:$0xf]
    %v715 = vld [vmem:[%s7 + $0x48] sm:$0xf]
    %v716 = vld [vmem:[%s7 + $0x4c] sm:$0xf]
    %v717 = vld [vmem:[%s7 + $0x50] sm:$0xf]
    %v718 = vld [vmem:[%s7 + $0x54] sm:$0xf]
    %v719 = vld [vmem:[%s7 + $0x58] sm:$0xf]
    %v720 = vld [vmem:[%s7 + $0x5c] sm:$0xf]
    %v721 = vld [vmem:[%s7 + $0x60] sm:$0xf]
    %v722 = vld [vmem:[%s7 + $0x64] sm:$0xf]
    %v723 = vld [vmem:[%s7 + $0x68] sm:$0xf]
    %v724 = vld [vmem:[%s7 + $0x6c] sm:$0xf]
    %v725 = vld [vmem:[%s8] sm:$0x1]
    %v726 = vld [vmem:[%s9] sm:$0x1]
    %v731 = vrot.slane %v693, 5
    %v732 = vrot.slane %v694, 5
    %v733 = vsel %vm98, %v731, %v732
    %v734 = vrot.slane %v695, 5
    %v735 = vrot.slane %v696, 5
    %v736 = vsel %vm98, %v734, %v735
    %v743 = vsel %vm98, 0.0, %v731
    %v744 = vsel %vm98, 0.0, %v734
    %v745 = vsel %vm98, %v732, 0.0
    %v746 = vsel %vm98, %v735, 0.0
    %v751 = vrot.slane %v743, 1
    %v752 = vrot.slane %v733, 1
    %v753 = vsel %vm119, %v751, %v752
    %v754 = vrot.slane %v745, 1
    %v755 = vsel %vm119, %v752, %v754
    %v756 = vrot.slane %v744, 1
    %v757 = vrot.slane %v736, 1
    %v758 = vsel %vm119, %v756, %v757
    %v759 = vrot.slane %v746, 1
    %v760 = vsel %vm119, %v757, %v759
    %761 = vrot.lane.b32.xlu0 %v753, 32
    %v762 = vpop.permute.xlu0 %761
    %763 = vrot.lane.b32.xlu0 %v755, 32
    %v764 = vpop.permute.xlu0 %763
    %765 = vrot.lane.b32.xlu0 %v758, 32
    %v766 = vpop.permute.xlu0 %765
    %767 = vrot.lane.b32.xlu0 %v760, 32
    %v768 = vpop.permute.xlu0 %767
    %v773 = vrot.slane %v743, 2
    %v774 = vrot.slane %v733, 2
    %v775 = vsel %vm142, %v773, %v774
    %v776 = vrot.slane %v745, 2
    %v777 = vsel %vm142, %v774, %v776
    %v778 = vrot.slane %v744, 2
    %v779 = vrot.slane %v736, 2
    %v780 = vsel %vm142, %v778, %v779
    %v781 = vrot.slane %v746, 2
    %v782 = vsel %vm142, %v779, %v781
    %783 = vrot.lane.b32.xlu0 %v775, 64
    %v784 = vpop.permute.xlu0 %783
    %785 = vrot.lane.b32.xlu0 %v777, 64
    %v786 = vpop.permute.xlu0 %785
    %787 = vrot.lane.b32.xlu0 %v780, 64
    %v788 = vpop.permute.xlu0 %787
    %789 = vrot.lane.b32.xlu0 %v782, 64
    %v790 = vpop.permute.xlu0 %789
    %v795 = vrot.slane %v743, 3
    %v796 = vrot.slane %v733, 3
    %v797 = vsel %vm165, %v795, %v796
    %v798 = vrot.slane %v745, 3
    %v799 = vsel %vm165, %v796, %v798
    %v800 = vrot.slane %v744, 3
    %v801 = vrot.slane %v736, 3
    %v802 = vsel %vm165, %v800, %v801
    %v803 = vrot.slane %v746, 3
    %v804 = vsel %vm165, %v801, %v803
    %805 = vrot.lane.b32.xlu0 %v797, 96
    %v806 = vpop.permute.xlu0 %805
    %807 = vrot.lane.b32.xlu0 %v799, 96
    %v808 = vpop.permute.xlu0 %807
    %809 = vrot.lane.b32.xlu0 %v802, 96
    %v810 = vpop.permute.xlu0 %809
    %811 = vrot.lane.b32.xlu0 %v804, 96
    %v812 = vpop.permute.xlu0 %811
    %v817 = vrot.slane %v743, 4
    %v818 = vrot.slane %v733, 4
    %v819 = vsel %vm188, %v817, %v818
    %v820 = vrot.slane %v745, 4
    %v821 = vsel %vm188, %v818, %v820
    %v822 = vrot.slane %v744, 4
    %v823 = vrot.slane %v736, 4
    %v824 = vsel %vm188, %v822, %v823
    %v825 = vrot.slane %v746, 4
    %v826 = vsel %vm188, %v823, %v825
    %v831 = vrot.slane %v743, 5
    %v832 = vrot.slane %v733, 5
    %v833 = vsel %vm98, %v831, %v832
    %v834 = vrot.slane %v745, 5
    %v835 = vsel %vm98, %v832, %v834
    %v836 = vrot.slane %v744, 5
    %v837 = vrot.slane %v736, 5
    %v838 = vsel %vm98, %v836, %v837
    %v839 = vrot.slane %v746, 5
    %v840 = vsel %vm98, %v837, %v839
    %841 = vrot.lane.b32.xlu0 %v833, 32
    %v842 = vpop.permute.xlu0 %841
    %843 = vrot.lane.b32.xlu0 %v835, 32
    %v844 = vpop.permute.xlu0 %843
    %845 = vrot.lane.b32.xlu0 %v838, 32
    %v846 = vpop.permute.xlu0 %845
    %847 = vrot.lane.b32.xlu0 %v840, 32
    %v848 = vpop.permute.xlu0 %847
    %v853 = vrot.slane %v743, 6
    %v854 = vrot.slane %v733, 6
    %v855 = vsel %vm233, %v853, %v854
    %v856 = vrot.slane %v745, 6
    %v857 = vsel %vm233, %v854, %v856
    %v858 = vrot.slane %v744, 6
    %v859 = vrot.slane %v736, 6
    %v860 = vsel %vm233, %v858, %v859
    %v861 = vrot.slane %v746, 6
    %v862 = vsel %vm233, %v859, %v861
    %863 = vrot.lane.b32.xlu0 %v855, 64
    %v864 = vpop.permute.xlu0 %863
    %865 = vrot.lane.b32.xlu0 %v857, 64
    %v866 = vpop.permute.xlu0 %865
    %867 = vrot.lane.b32.xlu0 %v860, 64
    %v868 = vpop.permute.xlu0 %867
    %869 = vrot.lane.b32.xlu0 %v862, 64
    %v870 = vpop.permute.xlu0 %869
    %v875 = vsel %vm524, %v743, %v762
    %v876 = vsel %vm524, %v733, %v764
    %v877 = vsel %vm524, %v744, %v766
    %v878 = vsel %vm524, %v736, %v768
    %v879 = vsel %vm529, %v875, %v784
    %v880 = vsel %vm529, %v876, %v786
    %v881 = vsel %vm529, %v877, %v788
    %v882 = vsel %vm529, %v878, %v790
    %v883 = vsel %vm534, %v879, %v806
    %v884 = vsel %vm534, %v880, %v808
    %v885 = vsel %vm534, %v881, %v810
    %v886 = vsel %vm534, %v882, %v812
    %v887 = vsel %vm524, %v819, %v842
    %v888 = vsel %vm524, %v821, %v844
    %v889 = vsel %vm524, %v824, %v846
    %v890 = vsel %vm524, %v826, %v848
    %v891 = vsel %vm529, %v887, %v864
    %v892 = vsel %vm529, %v888, %v866
    %v893 = vsel %vm529, %v889, %v868
    %v894 = vsel %vm529, %v890, %v870
    %v895 = vpack.c.bf16 %v884, %v883
    %v896 = vpack.c.bf16 %v892, %v891
    %v897 = vpack.c.bf16 %v886, %v885
    %v898 = vpack.c.bf16 %v894, %v893
    %v927 = vunpack.c.l.b16 %v697
    %v928 = vunpack.c.l.b16 %v698
    %v929 = vunpack.c.l.b16 %v699
    %v930 = vunpack.c.l.b16 %v700
    %v931 = vunpack.c.l.b16 %v701
    %v932 = vunpack.c.l.b16 %v702
    %v933 = vunpack.c.l.b16 %v703
    %v934 = vunpack.c.l.b16 %v704
    %v935 = vunpack.c.l.b16 %v705
    %v936 = vunpack.c.l.b16 %v706
    %v937 = vunpack.c.l.b16 %v707
    %v938 = vunpack.c.l.b16 %v708
    %v939 = vunpack.c.l.b16 %v709
    %v940 = vunpack.c.l.b16 %v710
    %v941 = vunpack.c.l.b16 %v711
    %v942 = vunpack.c.l.b16 %v712
    %v943 = vunpack.c.l.b16 %v713
    %v944 = vunpack.c.l.b16 %v714
    %v945 = vunpack.c.l.b16 %v715
    %v946 = vunpack.c.l.b16 %v716
    %v947 = vunpack.c.l.b16 %v717
    %v948 = vunpack.c.l.b16 %v718
    %v949 = vunpack.c.l.b16 %v719
    %v950 = vunpack.c.l.b16 %v720
    %v951 = vunpack.c.l.b16 %v721
    %v952 = vunpack.c.l.b16 %v722
    %v953 = vunpack.c.l.b16 %v723
    %v954 = vunpack.c.l.b16 %v724
    %v955 = vpack.c.b16 %v928, %v927
    %v956 = vpack.c.b16 %v930, %v929
    %v957 = vpack.c.b16 %v932, %v931
    %v958 = vpack.c.b16 %v934, %v933
    %v959 = vpack.c.b16 %v936, %v935
    %v960 = vpack.c.b16 %v938, %v937
    %v961 = vpack.c.b16 %v940, %v939
    %v962 = vpack.c.b16 %v942, %v941
    %v963 = vpack.c.b16 %v944, %v943
    %v964 = vpack.c.b16 %v946, %v945
    %v965 = vpack.c.b16 %v948, %v947
    %v966 = vpack.c.b16 %v950, %v949
    %v967 = vpack.c.b16 %v952, %v951
    %v968 = vpack.c.b16 %v954, %v953
    %v984 = vsel %vm534, %v896, 0
    %v987 = vsel %vm534, %v898, 0
    %989 = vmatpush.bf16.msra.mxu0 %v962
    %990 = vmatpush.bf16.msra.mxu0 %v961
    %991 = vmatpush.bf16.msra.mxu0 %v960
    %992 = vmatpush.bf16.msra.mxu0 %v959
    %993 = vmatpush.bf16.msra.mxu0 %v958
    %994 = vmatpush.bf16.msra.mxu0 %v957
    %995 = vmatpush.bf16.msra.mxu0 %v956
    %996 = vmatpush.bf16.msra.mxu0 %v955
    %997 = vmatmul.bf16.gmra.mxu0 %v895
    %v998 = vpop.f32.mrf.mxu0
    %v999 = vadd.f32 0.0, %v998
    %v1000 = vpop.f32.mrf.mxu0
    %v1001 = vadd.f32 0.0, %v1000
    %1002 = vmatmul.bf16.gmra.mxu0 %v897
    %v1003 = vpop.f32.mrf.mxu0
    %v1004 = vadd.f32 0.0, %v1003
    %v1005 = vpop.f32.mrf.mxu0
    %v1006 = vadd.f32 0.0, %v1005
    %1007 = vdwg.mxu0
    %1008 = vmatpush.bf16.msra.mxu0 0
    %1009 = vmatpush.bf16.msra.mxu0 0
    %1010 = vmatpush.bf16.msra.mxu0 %v968
    %1011 = vmatpush.bf16.msra.mxu0 %v967
    %1012 = vmatpush.bf16.msra.mxu0 %v966
    %1013 = vmatpush.bf16.msra.mxu0 %v965
    %1014 = vmatpush.bf16.msra.mxu0 %v964
    %1015 = vmatpush.bf16.msra.mxu0 %v963
    %1016 = vmatmul.bf16.gmra.mxu0 %v984
    %v1017 = vpop.f32.mrf.mxu0
    %v1018 = vadd.f32 %v999, %v1017
    %v1019 = vpop.f32.mrf.mxu0
    %v1020 = vadd.f32 %v1001, %v1019
    %1021 = vmatmul.bf16.gmra.mxu0 %v987
    %v1022 = vpop.f32.mrf.mxu0
    %v1023 = vadd.f32 %v1004, %v1022
    %v1024 = vpop.f32.mrf.mxu0
    %v1025 = vadd.f32 %v1006, %v1024
    %1026 = vdwg.mxu0
    %v1028 = vperm.slane %v725, 0
    %v1030 = vmul.f32 %v1018, %v1028
    %v1031 = vmul.f32 %v1020, %v1028
    %v1032 = vmul.f32 %v1023, %v1028
    %v1033 = vmul.f32 %v1025, %v1028
    %v1035 = vperm.slane %v726, 0
    %v1037 = vadd.f32 %v1030, %v1035
    %v1038 = vadd.f32 %v1031, %v1035
    %v1039 = vadd.f32 %v1032, %v1035
    %v1040 = vadd.f32 %v1033, %v1035
    %v1041 = vmax.f32 %v1037, 0.0
    %v1042 = vmax.f32 %v1038, 0.0
    %v1043 = vmax.f32 %v1039, 0.0
    %v1044 = vmax.f32 %v1040, 0.0
    %v1047 = vrot.slane %v1043, 7
    %vm1048 = vcmask 1041409
    %v1049 = vsel %vm1048, %v1047, %v1041
    %v1051 = vrot.slane %v1041, 1
    %v1052 = vsel %vm1048, %v1043, %v1051
    %1053 = vrot.lane.b32.xlu0 %v1052, 32
    %v1054 = vpop.permute.xlu0 %1053
    %v1056 = vrot.slane %v1041, 2
    %v1057 = vrot.slane %v1043, 1
    %v1058 = vsel %vm1048, %v1057, %v1056
    %1059 = vrot.lane.b32.xlu0 %v1058, 64
    %v1060 = vpop.permute.xlu0 %1059
    %v1062 = vrot.slane %v1041, 3
    %v1063 = vrot.slane %v1043, 2
    %v1064 = vsel %vm1048, %v1063, %v1062
    %1065 = vrot.lane.b32.xlu0 %v1064, 96
    %v1066 = vpop.permute.xlu0 %1065
    %v1068 = vrot.slane %v1041, 4
    %v1069 = vrot.slane %v1043, 3
    %v1070 = vsel %vm1048, %v1069, %v1068
    %v1072 = vrot.slane %v1041, 5
    %v1073 = vrot.slane %v1043, 4
    %v1074 = vsel %vm1048, %v1073, %v1072
    %1075 = vrot.lane.b32.xlu0 %v1074, 32
    %v1076 = vpop.permute.xlu0 %1075
    %v1078 = vrot.slane %v1041, 6
    %v1079 = vrot.slane %v1043, 5
    %v1080 = vsel %vm1048, %v1079, %v1078
    %1081 = vrot.lane.b32.xlu0 %v1080, 64
    %v1082 = vpop.permute.xlu0 %1081
    %v1084 = vrot.slane %v1041, 7
    %v1085 = vrot.slane %v1043, 6
    %v1086 = vsel %vm1048, %v1085, %v1084
    %1087 = vrot.lane.b32.xlu0 %v1086, 96
    %v1088 = vpop.permute.xlu0 %1087
    %v1092 = vrot.slane %v1044, 7
    %v1093 = vsel %vm1048, %v1092, %v1042
    %v1095 = vrot.slane %v1042, 1
    %v1096 = vsel %vm1048, %v1044, %v1095
    %1097 = vrot.lane.b32.xlu0 %v1096, 32
    %v1098 = vpop.permute.xlu0 %1097
    %v1100 = vrot.slane %v1042, 2
    %v1101 = vrot.slane %v1044, 1
    %v1102 = vsel %vm1048, %v1101, %v1100
    %1103 = vrot.lane.b32.xlu0 %v1102, 64
    %v1104 = vpop.permute.xlu0 %1103
    %v1106 = vrot.slane %v1042, 3
    %v1107 = vrot.slane %v1044, 2
    %v1108 = vsel %vm1048, %v1107, %v1106
    %1109 = vrot.lane.b32.xlu0 %v1108, 96
    %v1110 = vpop.permute.xlu0 %1109
    %v1112 = vrot.slane %v1042, 4
    %v1113 = vrot.slane %v1044, 3
    %v1114 = vsel %vm1048, %v1113, %v1112
    %v1116 = vrot.slane %v1042, 5
    %v1117 = vrot.slane %v1044, 4
    %v1118 = vsel %vm1048, %v1117, %v1116
    %1119 = vrot.lane.b32.xlu0 %v1118, 32
    %v1120 = vpop.permute.xlu0 %1119
    %v1122 = vrot.slane %v1042, 6
    %v1123 = vrot.slane %v1044, 5
    %v1124 = vsel %vm1048, %v1123, %v1122
    %1125 = vrot.lane.b32.xlu0 %v1124, 64
    %v1126 = vpop.permute.xlu0 %1125
    %v1128 = vrot.slane %v1042, 7
    %v1129 = vrot.slane %v1044, 6
    %v1130 = vsel %vm1048, %v1129, %v1128
    %1131 = vrot.lane.b32.xlu0 %v1130, 96
    %v1132 = vpop.permute.xlu0 %1131
    %v1134 = vsel %vm524, %v1049, %v1054
    %v1135 = vsel %vm529, %v1134, %v1060
    %v1136 = vsel %vm534, %v1135, %v1066
    %v1137 = vsel %vm524, %v1070, %v1076
    %v1138 = vsel %vm529, %v1137, %v1082
    %v1139 = vsel %vm534, %v1138, %v1088
    %v1140 = vsel %vm524, %v1093, %v1098
    %v1141 = vsel %vm529, %v1140, %v1104
    %v1142 = vsel %vm534, %v1141, %v1110
    %v1143 = vsel %vm524, %v1114, %v1120
    %v1144 = vsel %vm529, %v1143, %v1126
    %v1145 = vsel %vm534, %v1144, %v1132
    %v1146 = vpack.c.bf16 %v1136, %v1136
    %v1147 = vpack.c.bf16 %v1139, %v1139
    %v1148 = vpack.c.bf16 %v1142, %v1142
    %v1149 = vpack.c.bf16 %v1145, %v1145
    %v1150 = vld [vmem:[%s10] sm:$0xf]
    %v1151 = vld [vmem:[%s10 + $0x4] sm:$0xf]
    %v1152 = vld [vmem:[%s10 + $0x8] sm:$0xf]
    %v1153 = vld [vmem:[%s10 + $0xc] sm:$0xf]
    %v1154 = vld [vmem:[%s10 + $0x10] sm:$0xf]
    %v1155 = vld [vmem:[%s10 + $0x14] sm:$0xf]
    %v1156 = vld [vmem:[%s10 + $0x18] sm:$0xf]
    %v1157 = vld [vmem:[%s10 + $0x1c] sm:$0xf]
    %v1158 = vld [vmem:[%s10 + $0x20] sm:$0xf]
    %v1159 = vld [vmem:[%s10 + $0x24] sm:$0xf]
    %v1160 = vld [vmem:[%s10 + $0x28] sm:$0xf]
    %v1161 = vld [vmem:[%s10 + $0x2c] sm:$0xf]
    %v1162 = vld [vmem:[%s10 + $0x30] sm:$0xf]
    %v1163 = vld [vmem:[%s10 + $0x34] sm:$0xf]
    %v1164 = vld [vmem:[%s10 + $0x38] sm:$0xf]
    %v1165 = vld [vmem:[%s10 + $0x3c] sm:$0xf]
    %v1166 = vld [vmem:[%s10 + $0x40] sm:$0xf]
    %v1167 = vld [vmem:[%s10 + $0x44] sm:$0xf]
    %v1168 = vld [vmem:[%s10 + $0x48] sm:$0xf]
    %v1169 = vld [vmem:[%s10 + $0x4c] sm:$0xf]
    %v1170 = vld [vmem:[%s10 + $0x50] sm:$0xf]
    %v1171 = vld [vmem:[%s10 + $0x54] sm:$0xf]
    %v1172 = vld [vmem:[%s10 + $0x58] sm:$0xf]
    %v1173 = vld [vmem:[%s10 + $0x5c] sm:$0xf]
    %v1174 = vld [vmem:[%s10 + $0x60] sm:$0xf]
    %v1175 = vld [vmem:[%s10 + $0x64] sm:$0xf]
    %v1176 = vld [vmem:[%s10 + $0x68] sm:$0xf]
    %v1177 = vld [vmem:[%s10 + $0x6c] sm:$0xf]
    %v1178 = vld [vmem:[%s10 + $0x70] sm:$0xf]
    %v1179 = vld [vmem:[%s10 + $0x74] sm:$0xf]
    %v1180 = vld [vmem:[%s10 + $0x78] sm:$0xf]
    %v1181 = vld [vmem:[%s10 + $0x7c] sm:$0xf]
    %v1182 = vld [vmem:[%s10 + $0x80] sm:$0xf]
    %v1183 = vld [vmem:[%s10 + $0x84] sm:$0xf]
    %v1184 = vld [vmem:[%s10 + $0x88] sm:$0xf]
    %v1185 = vld [vmem:[%s10 + $0x8c] sm:$0xf]
    %v1186 = vld [vmem:[%s10 + $0x90] sm:$0xf]
    %v1187 = vld [vmem:[%s10 + $0x94] sm:$0xf]
    %v1188 = vld [vmem:[%s10 + $0x98] sm:$0xf]
    %v1189 = vld [vmem:[%s10 + $0x9c] sm:$0xf]
    %v1190 = vld [vmem:[%s10 + $0xa0] sm:$0xf]
    %v1191 = vld [vmem:[%s10 + $0xa4] sm:$0xf]
    %v1192 = vld [vmem:[%s10 + $0xa8] sm:$0xf]
    %v1193 = vld [vmem:[%s10 + $0xac] sm:$0xf]
    %v1194 = vld [vmem:[%s10 + $0xb0] sm:$0xf]
    %v1195 = vld [vmem:[%s10 + $0xb4] sm:$0xf]
    %v1196 = vld [vmem:[%s10 + $0xb8] sm:$0xf]
    %v1197 = vld [vmem:[%s10 + $0xbc] sm:$0xf]
    %v1198 = vld [vmem:[%s10 + $0xc0] sm:$0xf]
    %v1199 = vld [vmem:[%s10 + $0xc4] sm:$0xf]
    %v1200 = vld [vmem:[%s10 + $0xc8] sm:$0xf]
    %v1201 = vld [vmem:[%s10 + $0xcc] sm:$0xf]
    %v1202 = vld [vmem:[%s10 + $0xd0] sm:$0xf]
    %v1203 = vld [vmem:[%s10 + $0xd4] sm:$0xf]
    %v1204 = vld [vmem:[%s10 + $0xd8] sm:$0xf]
    %v1205 = vld [vmem:[%s10 + $0xdc] sm:$0xf]
    %v1206 = vld [vmem:[%s10 + $0xe0] sm:$0xf]
    %v1207 = vld [vmem:[%s10 + $0xe4] sm:$0xf]
    %v1208 = vld [vmem:[%s10 + $0xe8] sm:$0xf]
    %v1209 = vld [vmem:[%s10 + $0xec] sm:$0xf]
    %v1210 = vld [vmem:[%s10 + $0xf0] sm:$0xf]
    %v1211 = vld [vmem:[%s10 + $0xf4] sm:$0xf]
    %v1212 = vld [vmem:[%s10 + $0xf8] sm:$0xf]
    %v1213 = vld [vmem:[%s10 + $0xfc] sm:$0xf]
    %v1278 = vunpack.c.l.b16 %v1150
    %v1279 = vunpack.c.l.b16 %v1151
    %v1280 = vunpack.c.l.b16 %v1152
    %v1281 = vunpack.c.l.b16 %v1153
    %v1282 = vunpack.c.l.b16 %v1154
    %v1283 = vunpack.c.l.b16 %v1155
    %v1284 = vunpack.c.l.b16 %v1156
    %v1285 = vunpack.c.l.b16 %v1157
    %v1286 = vunpack.c.l.b16 %v1158
    %v1287 = vunpack.c.l.b16 %v1159
    %v1288 = vunpack.c.l.b16 %v1160
    %v1289 = vunpack.c.l.b16 %v1161
    %v1290 = vunpack.c.l.b16 %v1162
    %v1291 = vunpack.c.l.b16 %v1163
    %v1292 = vunpack.c.l.b16 %v1164
    %v1293 = vunpack.c.l.b16 %v1165
    %v1294 = vunpack.c.l.b16 %v1166
    %v1295 = vunpack.c.l.b16 %v1167
    %v1296 = vunpack.c.l.b16 %v1168
    %v1297 = vunpack.c.l.b16 %v1169
    %v1298 = vunpack.c.l.b16 %v1170
    %v1299 = vunpack.c.l.b16 %v1171
    %v1300 = vunpack.c.l.b16 %v1172
    %v1301 = vunpack.c.l.b16 %v1173
    %v1302 = vunpack.c.l.b16 %v1174
    %v1303 = vunpack.c.l.b16 %v1175
    %v1304 = vunpack.c.l.b16 %v1176
    %v1305 = vunpack.c.l.b16 %v1177
    %v1306 = vunpack.c.l.b16 %v1178
    %v1307 = vunpack.c.l.b16 %v1179
    %v1308 = vunpack.c.l.b16 %v1180
    %v1309 = vunpack.c.l.b16 %v1181
    %v1310 = vunpack.c.l.b16 %v1182
    %v1311 = vunpack.c.l.b16 %v1183
    %v1312 = vunpack.c.l.b16 %v1184
    %v1313 = vunpack.c.l.b16 %v1185
    %v1314 = vunpack.c.l.b16 %v1186
    %v1315 = vunpack.c.l.b16 %v1187
    %v1316 = vunpack.c.l.b16 %v1188
    %v1317 = vunpack.c.l.b16 %v1189
    %v1318 = vunpack.c.l.b16 %v1190
    %v1319 = vunpack.c.l.b16 %v1191
    %v1320 = vunpack.c.l.b16 %v1192
    %v1321 = vunpack.c.l.b16 %v1193
    %v1322 = vunpack.c.l.b16 %v1194
    %v1323 = vunpack.c.l.b16 %v1195
    %v1324 = vunpack.c.l.b16 %v1196
    %v1325 = vunpack.c.l.b16 %v1197
    %v1326 = vunpack.c.l.b16 %v1198
    %v1327 = vunpack.c.l.b16 %v1199
    %v1328 = vunpack.c.l.b16 %v1200
    %v1329 = vunpack.c.l.b16 %v1201
    %v1330 = vunpack.c.l.b16 %v1202
    %v1331 = vunpack.c.l.b16 %v1203
    %v1332 = vunpack.c.l.b16 %v1204
    %v1333 = vunpack.c.l.b16 %v1205
    %v1334 = vunpack.c.l.b16 %v1206
    %v1335 = vunpack.c.l.b16 %v1207
    %v1336 = vunpack.c.l.b16 %v1208
    %v1337 = vunpack.c.l.b16 %v1209
    %v1338 = vunpack.c.l.b16 %v1210
    %v1339 = vunpack.c.l.b16 %v1211
    %v1340 = vunpack.c.l.b16 %v1212
    %v1341 = vunpack.c.l.b16 %v1213
    %v1342 = vpack.c.b16 %v1279, %v1278
    %v1343 = vpack.c.b16 %v1281, %v1280
    %v1344 = vpack.c.b16 %v1283, %v1282
    %v1345 = vpack.c.b16 %v1285, %v1284
    %v1346 = vpack.c.b16 %v1287, %v1286
    %v1347 = vpack.c.b16 %v1289, %v1288
    %v1348 = vpack.c.b16 %v1291, %v1290
    %v1349 = vpack.c.b16 %v1293, %v1292
    %v1350 = vpack.c.b16 %v1295, %v1294
    %v1351 = vpack.c.b16 %v1297, %v1296
    %v1352 = vpack.c.b16 %v1299, %v1298
    %v1353 = vpack.c.b16 %v1301, %v1300
    %v1354 = vpack.c.b16 %v1303, %v1302
    %v1355 = vpack.c.b16 %v1305, %v1304
    %v1356 = vpack.c.b16 %v1307, %v1306
    %v1357 = vpack.c.b16 %v1309, %v1308
    %v1358 = vpack.c.b16 %v1311, %v1310
    %v1359 = vpack.c.b16 %v1313, %v1312
    %v1360 = vpack.c.b16 %v1315, %v1314
    %v1361 = vpack.c.b16 %v1317, %v1316
    %v1362 = vpack.c.b16 %v1319, %v1318
    %v1363 = vpack.c.b16 %v1321, %v1320
    %v1364 = vpack.c.b16 %v1323, %v1322
    %v1365 = vpack.c.b16 %v1325, %v1324
    %v1366 = vpack.c.b16 %v1327, %v1326
    %v1367 = vpack.c.b16 %v1329, %v1328
    %v1368 = vpack.c.b16 %v1331, %v1330
    %v1369 = vpack.c.b16 %v1333, %v1332
    %v1370 = vpack.c.b16 %v1335, %v1334
    %v1371 = vpack.c.b16 %v1337, %v1336
    %v1372 = vpack.c.b16 %v1339, %v1338
    %v1373 = vpack.c.b16 %v1341, %v1340
    %1406 = vmatpush.bf16.msra.mxu0 %v1349
    %1407 = vmatpush.bf16.msra.mxu0 %v1348
    %1408 = vmatpush.bf16.msra.mxu0 %v1347
    %1409 = vmatpush.bf16.msra.mxu0 %v1346
    %1410 = vmatpush.bf16.msra.mxu0 %v1345
    %1411 = vmatpush.bf16.msra.mxu0 %v1344
    %1412 = vmatpush.bf16.msra.mxu0 %v1343
    %1413 = vmatpush.bf16.msra.mxu0 %v1342
    %1414 = vmatmul.bf16.gmra.mxu0 %v1146
    %v1415 = vpop.f32.mrf.mxu0
    %v1416 = vadd.f32 0.0, %v1415
    %v1417 = vpop.f32.mrf.mxu0
    %1418 = vdwg.mxu0
    %1419 = vmatpush.bf16.msra.mxu0 %v1357
    %1420 = vmatpush.bf16.msra.mxu0 %v1356
    %1421 = vmatpush.bf16.msra.mxu0 %v1355
    %1422 = vmatpush.bf16.msra.mxu0 %v1354
    %1423 = vmatpush.bf16.msra.mxu0 %v1353
    %1424 = vmatpush.bf16.msra.mxu0 %v1352
    %1425 = vmatpush.bf16.msra.mxu0 %v1351
    %1426 = vmatpush.bf16.msra.mxu0 %v1350
    %1427 = vmatmul.bf16.gmra.mxu0 %v1147
    %v1428 = vpop.f32.mrf.mxu0
    %v1429 = vadd.f32 %v1416, %v1428
    %v1430 = vpop.f32.mrf.mxu0
    %1431 = vdwg.mxu0
    %1432 = vmatpush.bf16.msra.mxu0 %v1365
    %1433 = vmatpush.bf16.msra.mxu0 %v1364
    %1434 = vmatpush.bf16.msra.mxu0 %v1363
    %1435 = vmatpush.bf16.msra.mxu0 %v1362
    %1436 = vmatpush.bf16.msra.mxu0 %v1361
    %1437 = vmatpush.bf16.msra.mxu0 %v1360
    %1438 = vmatpush.bf16.msra.mxu0 %v1359
    %1439 = vmatpush.bf16.msra.mxu0 %v1358
    %1440 = vmatmul.bf16.gmra.mxu0 %v1148
    %v1441 = vpop.f32.mrf.mxu0
    %v1442 = vadd.f32 %v1429, %v1441
    %v1443 = vpop.f32.mrf.mxu0
    %1444 = vdwg.mxu0
    %1445 = vmatpush.bf16.msra.mxu0 %v1373
    %1446 = vmatpush.bf16.msra.mxu0 %v1372
    %1447 = vmatpush.bf16.msra.mxu0 %v1371
    %1448 = vmatpush.bf16.msra.mxu0 %v1370
    %1449 = vmatpush.bf16.msra.mxu0 %v1369
    %1450 = vmatpush.bf16.msra.mxu0 %v1368
    %1451 = vmatpush.bf16.msra.mxu0 %v1367
    %1452 = vmatpush.bf16.msra.mxu0 %v1366
    %1453 = vmatmul.bf16.gmra.mxu0 %v1149
    %v1454 = vpop.f32.mrf.mxu0
    %v1455 = vadd.f32 %v1442, %v1454
    %v1456 = vpop.f32.mrf.mxu0
    %1457 = vdwg.mxu0
    %v1458 = vld [vmem:[%s11] sm:$0x1]
    %v1460 = vperm.slane %v1458, 0
    %v1462 = vmul.f32 %v1455, %v1460
    %v1463 = vld [vmem:[%s12] sm:$0x1]
    %v1465 = vperm.slane %v1463, 0
    %v1467 = vadd.f32 %v1462, %v1465
    %v1468 = vmax.f32 %v1467, 0.0
    %v1469 = vpack.c.bf16 %v1468, %v1468
    %v1470 = vld [vmem:[#allocation5] sm:$0xf]
    %v1471 = vld [vmem:[#allocation5 + $0x4] sm:$0xf]
    %v1472 = vld [vmem:[#allocation5 + $0x8] sm:$0xf]
    %v1473 = vld [vmem:[#allocation5 + $0xc] sm:$0xf]
    %v1474 = vld [vmem:[#allocation5 + $0x10] sm:$0xf]
    %v1475 = vld [vmem:[#allocation5 + $0x14] sm:$0xf]
    %v1476 = vld [vmem:[#allocation5 + $0x18] sm:$0xf]
    %v1477 = vld [vmem:[#allocation5 + $0x1c] sm:$0xf]
    %v1478 = vld [vmem:[#allocation5 + $0x20] sm:$0xf]
    %v1479 = vld [vmem:[#allocation5 + $0x24] sm:$0xf]
    %v1480 = vld [vmem:[#allocation5 + $0x28] sm:$0xf]
    %v1481 = vld [vmem:[#allocation5 + $0x2c] sm:$0xf]
    %v1482 = vld [vmem:[#allocation5 + $0x30] sm:$0xf]
    %v1483 = vld [vmem:[#allocation5 + $0x34] sm:$0xf]
    %v1484 = vld [vmem:[#allocation5 + $0x38] sm:$0xf]
    %v1485 = vld [vmem:[#allocation5 + $0x3c] sm:$0xf]
    %v1486 = vld [vmem:[%s14] sm:$0x1]
    %v1488 = vperm.slane %v1486, 0
    %v1506 = vunpack.c.l.b16 %v1470
    %v1507 = vunpack.c.l.b16 %v1471
    %v1508 = vunpack.c.l.b16 %v1472
    %v1509 = vunpack.c.l.b16 %v1473
    %v1510 = vunpack.c.l.b16 %v1474
    %v1511 = vunpack.c.l.b16 %v1475
    %v1512 = vunpack.c.l.b16 %v1476
    %v1513 = vunpack.c.l.b16 %v1477
    %v1514 = vunpack.c.l.b16 %v1478
    %v1515 = vunpack.c.l.b16 %v1479
    %v1516 = vunpack.c.l.b16 %v1480
    %v1517 = vunpack.c.l.b16 %v1481
    %v1518 = vunpack.c.l.b16 %v1482
    %v1519 = vunpack.c.l.b16 %v1483
    %v1520 = vunpack.c.l.b16 %v1484
    %v1521 = vunpack.c.l.b16 %v1485
    %v1522 = vpack.c.b16 %v1507, %v1506
    %v1523 = vpack.c.b16 %v1509, %v1508
    %v1524 = vpack.c.b16 %v1511, %v1510
    %v1525 = vpack.c.b16 %v1513, %v1512
    %v1526 = vpack.c.b16 %v1515, %v1514
    %v1527 = vpack.c.b16 %v1517, %v1516
    %v1528 = vpack.c.b16 %v1519, %v1518
    %v1529 = vpack.c.b16 %v1521, %v1520
    %1538 = vmatpush.bf16.msra.mxu0 %v1529
    %1539 = vmatpush.bf16.msra.mxu0 %v1528
    %1540 = vmatpush.bf16.msra.mxu0 %v1527
    %1541 = vmatpush.bf16.msra.mxu0 %v1526
    %1542 = vmatpush.bf16.msra.mxu0 %v1525
    %1543 = vmatpush.bf16.msra.mxu0 %v1524
    %1544 = vmatpush.bf16.msra.mxu0 %v1523
    %1545 = vmatpush.bf16.msra.mxu0 %v1522
    %1546 = vmatmul.bf16.gmra.mxu0 %v1469
    %v1547 = vpop.f32.mrf.mxu0
    %v1548 = vadd.f32 %v1488, %v1547
    %v1549 = vpop.f32.mrf.mxu0
    %1550 = vdwg.mxu0
    %v1551 = vsel %vm233, %v1548, -inf
    %1552 = vmax.xlane.f32.xlu0 %v1551
    %v1553 = vpop.xlane.xlu0 %1552
    %v1554 = vsub.f32 %v1548, %v1553
    %v1555 = vmul.f32 %v1554, 1.442695
    %v1556 = vpow.pop %v1555
    %v1557 = vsel %vm233, %v1556, 0.0
    %1558 = vadd.xlane.f32.xlu0 %v1557
    %v1559 = vpop.xlane.xlu0 %1558
    %v1560 = vlog2.pop %v1559
    %v1561 = vmul.f32 %v1560, 0.6931472
    %v1562 = vsub.f32 %v1554, %v1561
    %1563 = vst [vmem:[#allocation7] sm:$0x3] %v1562
    // Predicated region
    $region70: #{tpu_custom_call.1} parent=1 // pred_check
      _
    $region71: #{tpu_custom_call.1} parent=1 // pred_check_branch
      %1565 = sbr.rel (0) target = $region73
    $region72: #{tpu_custom_call.1} parent=1 // pred_region
      %1567 = vsyncadd [#allocation4], 0
      %s1569 = sshll.u32 [#allocation7], 4
      %s1570 = int_to_ptr.vmem [resolvable:$true] %s1569
      %s1571 = sshll.u32 %s15, 4
      %s1572 = int_to_ptr.hbm [resolvable:$true] %s1571
      %1574 = dma.vmem_to_hbm [thread:$0]  %s1570, 32, %s1572, [#allocation4]
    $region73: #{tpu_custom_call.1} parent=1 // pred_fallthru
      _
    // Predicated region
    $region74: #{tpu_custom_call.1} parent=1 // pred_check
      _
    $region75: #{tpu_custom_call.1} parent=1 // pred_check_branch
      %1576 = sbr.rel (0) target = $region77
    $region76: #{tpu_custom_call.1} parent=1 // pred_region
      %1578 = dma.done [#allocation4], 32
    $region77: #{tpu_custom_call.1} parent=1 // pred_fallthru
      _
    %1579 = vsyncpa [#allocation3], 1
    %1580 = vsyncpa [#allocation6], 1
    %1581 = vsyncpa [#allocation4], 1

</llo_original>
